<compile_context>
chip_gen: v5e
topology: v5e:2x2
jax: 0.10.0
libtpu: 0.0.40
codegen_flags: <defaults>
</compile_context>

<pallas_src>
import functools

import jax
import jax.numpy as jnp
import numpy as np
from jax import lax
from jax.experimental import pallas as pl
from jax.experimental.pallas import tpu as pltpu


def _funnel_kernel(split, Cp, kh, kw, Ho, Hp3, L,
                   x_ref, dw1_ref, dw2_ref, dw3_ref,
                   ba1_ref, ba2_ref, ba3_ref, pw_ref, bb_ref, rm_ref,
                   out_ref, sh_ref):
    """One grid step = B lane-packed images (row-slab formulation).

    x_ref  : (Hp3, Cp, L + kw - 1) padded+packed input (C on sublanes, lanes = B*Wp padded)
    out_ref: (Ho, 4*split, L)      per-row packed output (channels on sublanes)
    sh_ref : ((kw-1)*Hp3, Cp, L)   hoisted lane-shifted copies for dwi = 1..kw-1
    pw_ref : (4*split, 4*Cp)       block-diagonal pointwise weights [pw1|pw2|pw3|pw4]
    """
    # Hoist the kw-1 nontrivial lane shifts once per grid step (dwi == 0 is read
    # directly from x_ref -- copying it would be pure store traffic).
    for dwi in range(1, kw):
        sh_ref[pl.ds((dwi - 1) * Hp3, Hp3)] = x_ref[:, :, pl.ds(dwi, L)]

    pw_blk = pw_ref[...]          # (4*split, 4*Cp)
    bb_col = bb_ref[...]          # (4*split, 1)
    rm_col = rm_ref[...]          # (4*split, 1) 1.0 for relu'd rows, 0.0 for maxpool rows
    ba1 = ba1_ref[...]            # (Cp, 1)
    ba2 = ba2_ref[...]
    ba3 = ba3_ref[...]

    kh2, kh3 = 2 * kh, 3 * kh

    def row_body(h, carry):
        def tap(d, dwi):
            if dwi == 0:
                return x_ref[h + d, :, pl.ds(0, L)]
            return sh_ref[(dwi - 1) * Hp3 + h + d]

        zero = jnp.zeros((Cp, L), jnp.float32)
        a3 = [zero, zero]         # two independent FMA chains per deep branch (ILP)
        a2 = [zero, zero]
        a1 = zero
        mx = None
        # Fused sweep: each shifted plane is loaded once and consumed by every
        # branch whose row window contains it.
        for d in range(kh3):
            for dwi in range(kw):
                p = tap(d, dwi)
                t3 = d * kw + dwi
                i = t3 & 1
                a3[i] = a3[i] + p * dw3_ref[:, t3:t3 + 1]
                if 3 <= d < 3 + kh2:
                    t2 = (d - 3) * kw + dwi
                    a2[i] = a2[i] + p * dw2_ref[:, t2:t2 + 1]
                if 6 <= d < 6 + kh:
                    t1 = (d - 6) * kw + dwi
                    a1 = a1 + p * dw1_ref[:, t1:t1 + 1]
                    mx = p if mx is None else jnp.maximum(mx, p)

        y1 = jnp.maximum(a1 + ba1, 0.0)
        y2 = jnp.maximum(a2[0] + a2[1] + ba2, 0.0)
        y3 = jnp.maximum(a3[0] + a3[1] + ba3, 0.0)
        y = jnp.concatenate([y1, y2, y3, mx], axis=0)            # (4*Cp, L)

        # All four pointwise 1x1 convs as one MXU matmul.
        z = jnp.dot(pw_blk, y, preferred_element_type=jnp.float32) + bb_col
        zr = jnp.maximum(z, 0.0)
        out_ref[h] = rm_col * zr + (1.0 - rm_col) * z            # relu only on conv rows
        return carry

    lax.fori_loop(0, Ho, row_body, 0)


def _num_cores_and_v7():
    """(# TensorCores a 'parallel' grid axis can use, is_v7x) -- best effort."""
    try:
        kind = (jax.devices()[0].device_kind or "").lower()
    except Exception:
        return 1, False
    is_v7 = ("v7" in kind) or ("7x" in kind)
    two_core = is_v7 or ("v4" in kind) or ("v5p" in kind)
    return (2 if two_core else 1), is_v7


def funnel_block(x, params, *, kernel=(6, 3), stride=(1, 1), zero_pad=(1, 1, 0, 0)):
    # TODO(synk): general stride would require strided subsampling of the conv
    # outputs inside the kernel; only stride=(1,1) is implemented here.
    assert stride == (1, 1)
    N, C, H, W = x.shape
    kh, kw = kernel
    l, r, t, b = zero_pad          # PyTorch ZeroPad2d order: (left, right, top, bottom)
    # The module's fixed +3/+6 extra vertical padding only lines the three
    # branch output heights up for kh == 6; fail loudly otherwise.
    assert kh == 6, "Funnel_Block branch alignment requires kernel[0] == 6"

    Hp1 = H + t + b
    Hp3 = Hp1 + 12
    Wp = W + l + r
    Ho = Hp1 - kh + 1              # == Hp3 - 3*kh + 1 (kh == 6)
    Wo = Wp - kw + 1
    assert Ho >= 1 and Wo >= 1
    split = params['pw1'].shape[0]
    OP = 4 * split
    Cp = -(-C // 8) * 8            # channels live on sublanes -> pad to a multiple of 8

    # --- batch / lane packing -------------------------------------------------
    ntc, is_v7 = _num_cores_and_v7()
    max_pack = max(1, 128 // Wp)
    min_grid = ntc if N >= ntc else 1          # only force >=2 grid steps on 2-TC parts
    B = max(1, min(max_pack, -(-N // min_grid)))
    G = -(-N // B)
    N_pad = G * B
    L = max(128, -(-(B * Wp) // 128) * 128)    # lane-dense blocks: L is a multiple of 128
    Lin = L + kw - 1                           # shift tail keeps hoisted lane shifts in-bounds

    # Single padded copy (most-padded branch); the shallower branches and the
    # maxpool read vertically-offset windows of it inside the kernel.
    x3p = jnp.pad(x, ((0, N_pad - N), (0, Cp - C), (t + 6, b + 6), (l, r)))
    xp = (x3p.reshape(G, B, Cp, Hp3, Wp)
              .transpose(0, 3, 2, 1, 4)         # (G, Hp3, Cp, B, Wp)
              .reshape(G, Hp3, Cp, B * Wp))
    xp = jnp.pad(xp, ((0, 0), (0, 0), (0, 0), (0, Lin - B * Wp)))

    # --- weight packing (channel-padded; pointwise as one block-diag matrix) ---
    f32 = jnp.float32

    def pad_rows(a):
        return jnp.pad(a.astype(f32), ((0, Cp - C), (0, 0)))

    dw1 = pad_rows(params['dw1'])              # (Cp, kh*kw)
    dw2 = pad_rows(params['dw2'])              # (Cp, 2*kh*kw)
    dw3 = pad_rows(params['dw3'])              # (Cp, 3*kh*kw)
    ba1 = jnp.pad(params['ba1'].astype(f32), (0, Cp - C)).reshape(Cp, 1)
    ba2 = jnp.pad(params['ba2'].astype(f32), (0, Cp - C)).reshape(Cp, 1)
    ba3 = jnp.pad(params['ba3'].astype(f32), (0, Cp - C)).reshape(Cp, 1)
    pw_blk = jnp.zeros((OP, 4 * Cp), f32)
    for bi, name in enumerate(('pw1', 'pw2', 'pw3', 'pw4')):
        pw_blk = pw_blk.at[bi * split:(bi + 1) * split,
                           bi * Cp:bi * Cp + C].set(params[name].astype(f32))
    bb_col = jnp.concatenate([params['bb1'], params['bb2'], params['bb3'],
                              jnp.zeros((split,), f32)]).astype(f32).reshape(OP, 1)
    rm_col = jnp.concatenate([jnp.ones((3 * split, 1), f32),
                              jnp.zeros((split, 1), f32)], axis=0)

    def full_spec(arr):
        zeros = (0,) * arr.ndim
        return pl.BlockSpec(arr.shape, lambda g: zeros)

    n_sh = max(kw - 1, 1)

    # Explicit VMEM budget (double-buffered blocks + scratch), capped lower on
    # v7x's 64 MiB physical VMEM.
    lin_pad = -(-Lin // 128) * 128
    need = (2 * Hp3 * Cp * lin_pad * 4           # input block, double-buffered
            + 2 * Ho * OP * L * 4                # output block, double-buffered
            + n_sh * Hp3 * Cp * L * 4            # lane-shift scratch
            + 2 * 1024 * 1024)                   # weights + slack
    cap = (56 if is_v7 else 100) * 1024 * 1024
    vmem_limit = int(min(cap, max(32 * 1024 * 1024, 2 * need)))

    taps = (3 * kh + 2 * kh + kh) * kw
    flops = G * Ho * (2 * Cp * L * taps + 2 * OP * 4 * Cp * L)
    bytes_accessed = int(xp.size * 4 + G * Ho * OP * L * 4
                         + (dw1.size + dw2.size + dw3.size + pw_blk.size) * 4)

    kernel_fn = functools.partial(_funnel_kernel, split, Cp, kh, kw, Ho, Hp3, L)

    out_packed = pl.pallas_call(
        kernel_fn,
        out_shape=jax.ShapeDtypeStruct((G, Ho, OP, L), jnp.float32),
        grid=(G,),
        in_specs=[pl.BlockSpec((None, Hp3, Cp, Lin), lambda g: (g, 0, 0, 0)),
                  full_spec(dw1), full_spec(dw2), full_spec(dw3),
                  full_spec(ba1), full_spec(ba2), full_spec(ba3),
                  full_spec(pw_blk), full_spec(bb_col), full_spec(rm_col)],
        out_specs=pl.BlockSpec((None, Ho, OP, L), lambda g: (g, 0, 0, 0)),
        scratch_shapes=[pltpu.VMEM((n_sh * Hp3, Cp, L), jnp.float32)],
        compiler_params=pltpu.CompilerParams(
            dimension_semantics=("parallel",),
            vmem_limit_bytes=vmem_limit),
        cost_estimate=pl.CostEstimate(flops=int(flops), transcendentals=0,
                                      bytes_accessed=bytes_accessed),
    )(xp, dw1, dw2, dw3, ba1, ba2, ba3, pw_blk, bb_col, rm_col)

    # Unpack lanes: keep the first Wo lanes of each Wp-wide segment, then NCHW.
    out = (out_packed[..., :B * Wp]
           .reshape(G, Ho, OP, B, Wp)[..., :Wo]
           .transpose(0, 3, 2, 1, 4)
           .reshape(N_pad, OP, Ho, Wo))
    return out[:N]


def init_params(key, in_planes, out_planes, kernel):
    """Deterministic synthetic weights; BN (eval mode) folded into conv scale/bias."""
    kh, kw = kernel
    split = out_planes // 4
    eps = 1e-5
    keys = iter(jax.random.split(key, 32))

    def bn_fold(n):
        gamma = 1.0 + 0.1 * jax.random.normal(next(keys), (n,), jnp.float32)
        beta = 0.1 * jax.random.normal(next(keys), (n,), jnp.float32)
        mean = 0.1 * jax.random.normal(next(keys), (n,), jnp.float32)
        var = 1.0 + 0.1 * jax.random.uniform(next(keys), (n,), jnp.float32)
        s = gamma / jnp.sqrt(var + eps)
        return s, beta - s * mean

    params = {}
    for i, mult in enumerate((1, 2, 3), start=1):
        khi = kh * mult
        dw = 0.3 * jax.random.normal(next(keys), (in_planes, khi, kw), jnp.float32)
        s1, b1 = bn_fold(in_planes)
        pw = 0.3 * jax.random.normal(next(keys), (split, in_planes), jnp.float32)
        s2, b2 = bn_fold(split)
        params[f'dw{i}'] = (dw * s1[:, None, None]).reshape(in_planes, khi * kw)
        params[f'ba{i}'] = b1
        params[f'pw{i}'] = pw * s2[:, None]
        params[f'bb{i}'] = b2
    params['pw4'] = 0.3 * jax.random.normal(next(keys), (split, in_planes), jnp.float32)
    return params


def funnel_reference(x, params, kernel, zero_pad):
    """Pure-JAX (XLA) reference using the same folded parameters."""
    kh, kw = kernel
    l, r, t, b = zero_pad
    C = x.shape[1]
    dn = ('NCHW', 'OIHW', 'NCHW')

    def branch(xp, dw, ba, pw, bb, khi):
        w_dw = dw.reshape(C, khi, kw)[:, None, :, :]
        y = lax.conv_general_dilated(xp, w_dw, (1, 1), 'VALID',
                                     dimension_numbers=dn, feature_group_count=C)
        y = jax.nn.relu(y + ba[None, :, None, None])
        z = lax.conv_general_dilated(y, pw[:, :, None, None], (1, 1), 'VALID',
                                     dimension_numbers=dn)
        return jax.nn.relu(z + bb[None, :, None, None])

    x1p = jnp.pad(x, ((0, 0), (0, 0), (t, b), (l, r)))
    x2p = jnp.pad(x, ((0, 0), (0, 0), (t + 3, b + 3), (l, r)))
    x3p = jnp.pad(x, ((0, 0), (0, 0), (t + 6, b + 6), (l, r)))
    o1 = branch(x1p, params['dw1'], params['ba1'], params['pw1'], params['bb1'], kh)
    o2 = branch(x2p, params['dw2'], params['ba2'], params['pw2'], params['bb2'], 2 * kh)
    o3 = branch(x3p, params['dw3'], params['ba3'], params['pw3'], params['bb3'], 3 * kh)
    mp = lax.reduce_window(x1p, -jnp.inf, lax.max, (1, 1, kh, kw), (1, 1, 1, 1), 'VALID')
    o4 = lax.conv_general_dilated(mp, params['pw4'][:, :, None, None], (1, 1), 'VALID',
                                  dimension_numbers=dn)
    return jnp.concatenate([o1, o2, o3, o4], axis=1)


if __name__ == "__main__":
    key = jax.random.PRNGKey(0)
    kernel = (6, 3)
    zero_pad = (1, 1, 0, 0)

    # Two small configs: the first matches the module's typical tiny-test shape;
    # the second exercises a wider channel count (MXU contraction dim = 4*C).
    configs = [
        dict(N=4, C=4, H=16, W=16, out_planes=8),
        dict(N=2, C=32, H=12, W=16, out_planes=16),
    ]

    for cfg in configs:
        key, kx, kp = jax.random.split(key, 3)
        x = jax.random.normal(kx, (cfg['N'], cfg['C'], cfg['H'], cfg['W']), jnp.float32)
        params = init_params(kp, cfg['C'], cfg['out_planes'], kernel)

        out = funnel_block(x, params, kernel=kernel, stride=(1, 1), zero_pad=zero_pad)
        out = jax.block_until_ready(out)

        ref = funnel_reference(x, params, kernel, zero_pad)
        Ho = cfg['H'] + zero_pad[2] + zero_pad[3] - kernel[0] + 1
        Wo = cfg['W'] + zero_pad[0] + zero_pad[1] - kernel[1] + 1
        assert out.shape == (cfg['N'], cfg['out_planes'], Ho, Wo), out.shape
        np.testing.assert_allclose(np.asarray(out), np.asarray(ref),
                                   atol=2e-4, rtol=2e-3)

    print("KERNEL_OK")
</pallas_src>

<mosaic_0001>
module attributes {stable_mosaic.version = 11 : i64} {
  func.func @_funnel_kernel(%arg0: i32, %arg1: memref<1x28x8x130xf32, #tpu.memory_space<vmem>>, %arg2: memref<8x18xf32, #tpu.memory_space<vmem>>, %arg3: memref<8x36xf32, #tpu.memory_space<vmem>>, %arg4: memref<8x54xf32, #tpu.memory_space<vmem>>, %arg5: memref<8x1xf32, #tpu.memory_space<vmem>>, %arg6: memref<8x1xf32, #tpu.memory_space<vmem>>, %arg7: memref<8x1xf32, #tpu.memory_space<vmem>>, %arg8: memref<8x32xf32, #tpu.memory_space<vmem>>, %arg9: memref<8x1xf32, #tpu.memory_space<vmem>>, %arg10: memref<8x1xf32, #tpu.memory_space<vmem>>, %arg11: memref<1x11x8x128xf32, #tpu.memory_space<vmem>>, %arg12: memref<56x8x128xf32, #tpu.memory_space<vmem>>) attributes {dimension_semantics = [#tpu.dimension_semantics<parallel>], iteration_bounds = array<i64: 1>, scalar_prefetch = 0 : i64, scratch_operands = 1 : i64, tpu.core_type = #tpu.core_type<tc>, window_params = [{transform_indices = @transform_0, window_bounds = array<i64: 1, 28, 8, 130>}, {pipeline_mode = #tpu.pipeline_mode<synchronous>, transform_indices = @transform_1, window_bounds = array<i64: 8, 18>}, {pipeline_mode = #tpu.pipeline_mode<synchronous>, transform_indices = @transform_2, window_bounds = array<i64: 8, 36>}, {pipeline_mode = #tpu.pipeline_mode<synchronous>, transform_indices = @transform_3, window_bounds = array<i64: 8, 54>}, {pipeline_mode = #tpu.pipeline_mode<synchronous>, transform_indices = @transform_4, window_bounds = array<i64: 8, 1>}, {pipeline_mode = #tpu.pipeline_mode<synchronous>, transform_indices = @transform_5, window_bounds = array<i64: 8, 1>}, {pipeline_mode = #tpu.pipeline_mode<synchronous>, transform_indices = @transform_6, window_bounds = array<i64: 8, 1>}, {pipeline_mode = #tpu.pipeline_mode<synchronous>, transform_indices = @transform_7, window_bounds = array<i64: 8, 32>}, {pipeline_mode = #tpu.pipeline_mode<synchronous>, transform_indices = @transform_8, window_bounds = array<i64: 8, 1>}, {pipeline_mode = #tpu.pipeline_mode<synchronous>, transform_indices = @transform_9, window_bounds = array<i64: 8, 1>}, {transform_indices = @transform_10, window_bounds = array<i64: 1, 11, 8, 128>}]} {
    %c0 = arith.constant 0 : index
    %c0_0 = arith.constant 0 : index
    %c0_1 = arith.constant 0 : index
    %c1 = arith.constant 1 : index
    %0 = vector.load %arg1[%c0, %c0_0, %c0_1, %c1] : memref<1x28x8x130xf32, #tpu.memory_space<vmem>>, vector<1x28x8x128xf32>
    %1 = vector.shape_cast %0 : vector<1x28x8x128xf32> to vector<28x8x128xf32>
    %c0_2 = arith.constant 0 : index
    %c0_3 = arith.constant 0 : index
    %c0_4 = arith.constant 0 : index
    %2 = vector.load %arg12[%c0_2, %c0_3, %c0_4] : memref<56x8x128xf32, #tpu.memory_space<vmem>>, vector<28x8x128xf32>
    tpu.vector_store %arg12[%c0_2, %c0_3, %c0_4], %1 {strides = array<i32>} : memref<56x8x128xf32, #tpu.memory_space<vmem>>, vector<28x8x128xf32>,
    %c0_5 = arith.constant 0 : index
    %c0_6 = arith.constant 0 : index
    %c0_7 = arith.constant 0 : index
    %c2 = arith.constant 2 : index
    %3 = vector.load %arg1[%c0_5, %c0_6, %c0_7, %c2] : memref<1x28x8x130xf32, #tpu.memory_space<vmem>>, vector<1x28x8x128xf32>
    %4 = vector.shape_cast %3 : vector<1x28x8x128xf32> to vector<28x8x128xf32>
    %c28 = arith.constant 28 : index
    %c0_8 = arith.constant 0 : index
    %c0_9 = arith.constant 0 : index
    %5 = vector.load %arg12[%c28, %c0_8, %c0_9] : memref<56x8x128xf32, #tpu.memory_space<vmem>>, vector<28x8x128xf32>
    tpu.vector_store %arg12[%c28, %c0_8, %c0_9], %4 {strides = array<i32>} : memref<56x8x128xf32, #tpu.memory_space<vmem>>, vector<28x8x128xf32>,
    %c0_10 = arith.constant 0 : index
    %c0_11 = arith.constant 0 : index
    %6 = vector.load %arg8[%c0_10, %c0_11] : memref<8x32xf32, #tpu.memory_space<vmem>>, vector<8x32xf32>
    %c0_12 = arith.constant 0 : index
    %c0_13 = arith.constant 0 : index
    %7 = vector.load %arg9[%c0_12, %c0_13] : memref<8x1xf32, #tpu.memory_space<vmem>>, vector<8x1xf32>
    %c0_14 = arith.constant 0 : index
    %c0_15 = arith.constant 0 : index
    %8 = vector.load %arg10[%c0_14, %c0_15] : memref<8x1xf32, #tpu.memory_space<vmem>>, vector<8x1xf32>
    %c0_16 = arith.constant 0 : index
    %c0_17 = arith.constant 0 : index
    %9 = vector.load %arg5[%c0_16, %c0_17] : memref<8x1xf32, #tpu.memory_space<vmem>>, vector<8x1xf32>
    %c0_18 = arith.constant 0 : index
    %c0_19 = arith.constant 0 : index
    %10 = vector.load %arg6[%c0_18, %c0_19] : memref<8x1xf32, #tpu.memory_space<vmem>>, vector<8x1xf32>
    %c0_20 = arith.constant 0 : index
    %c0_21 = arith.constant 0 : index
    %11 = vector.load %arg7[%c0_20, %c0_21] : memref<8x1xf32, #tpu.memory_space<vmem>>, vector<8x1xf32>
    %c0_i32 = arith.constant 0 : i32
    %c11_i32 = arith.constant 11 : i32
    %12 = arith.addi %c0_i32, %c11_i32 : i32
    %c1_i32 = arith.constant 1 : i32
    scf.for %arg13 = %c0_i32 to %12 step %c1_i32  : i32 {
      %cst = arith.constant 0.000000e+00 : f32
      %13 = vector.broadcast %cst : f32 to vector<8x128xf32>
      %c0_i32_23 = arith.constant 0 : i32
      %14 = arith.addi %arg13, %c0_i32_23 : i32
      %c0_24 = arith.constant 0 : index
      %15 = arith.index_cast %14 : i32 to index
      %c0_25 = arith.constant 0 : index
      %c0_26 = arith.constant 0 : index
      %16 = vector.load %arg1[%c0_24, %15, %c0_25, %c0_26] : memref<1x28x8x130xf32, #tpu.memory_space<vmem>>, vector<1x1x8x128xf32>
      %17 = vector.shape_cast %16 : vector<1x1x8x128xf32> to vector<8x128xf32>
      %c0_27 = arith.constant 0 : index
      %c0_28 = arith.constant 0 : index
      %18 = vector.load %arg4[%c0_27, %c0_28] : memref<8x54xf32, #tpu.memory_space<vmem>>, vector<8x1xf32>
      %19 = vector.broadcast %18 : vector<8x1xf32> to vector<8x128xf32>
      %20 = arith.mulf %17, %19 : vector<8x128xf32>
      %21 = arith.addf %13, %20 : vector<8x128xf32>
      %c0_i32_29 = arith.constant 0 : i32
      %22 = arith.addi %c0_i32_29, %arg13 : i32
      %c0_i32_30 = arith.constant 0 : i32
      %23 = arith.addi %22, %c0_i32_30 : i32
      %24 = arith.index_cast %23 : i32 to index
      %c0_31 = arith.constant 0 : index
      %c0_32 = arith.constant 0 : index
      %25 = vector.load %arg12[%24, %c0_31, %c0_32] : memref<56x8x128xf32, #tpu.memory_space<vmem>>, vector<1x8x128xf32>
      %26 = vector.shape_cast %25 : vector<1x8x128xf32> to vector<8x128xf32>
      %c0_33 = arith.constant 0 : index
      %c1_34 = arith.constant 1 : index
      %27 = vector.load %arg4[%c0_33, %c1_34] : memref<8x54xf32, #tpu.memory_space<vmem>>, vector<8x1xf32>
      %28 = vector.broadcast %27 : vector<8x1xf32> to vector<8x128xf32>
      %29 = arith.mulf %26, %28 : vector<8x128xf32>
      %30 = arith.addf %13, %29 : vector<8x128xf32>
      %c28_i32 = arith.constant 28 : i32
      %31 = arith.addi %c28_i32, %arg13 : i32
      %c0_i32_35 = arith.constant 0 : i32
      %32 = arith.addi %31, %c0_i32_35 : i32
      %33 = arith.index_cast %32 : i32 to index
      %c0_36 = arith.constant 0 : index
      %c0_37 = arith.constant 0 : index
      %34 = vector.load %arg12[%33, %c0_36, %c0_37] : memref<56x8x128xf32, #tpu.memory_space<vmem>>, vector<1x8x128xf32>
      %35 = vector.shape_cast %34 : vector<1x8x128xf32> to vector<8x128xf32>
      %c0_38 = arith.constant 0 : index
      %c2_39 = arith.constant 2 : index
      %36 = vector.load %arg4[%c0_38, %c2_39] : memref<8x54xf32, #tpu.memory_space<vmem>>, vector<8x1xf32>
      %37 = vector.broadcast %36 : vector<8x1xf32> to vector<8x128xf32>
      %38 = arith.mulf %35, %37 : vector<8x128xf32>
      %39 = arith.addf %21, %38 : vector<8x128xf32>
      %c1_i32_40 = arith.constant 1 : i32
      %40 = arith.addi %arg13, %c1_i32_40 : i32
      %c0_41 = arith.constant 0 : index
      %41 = arith.index_cast %40 : i32 to index
      %c0_42 = arith.constant 0 : index
      %c0_43 = arith.constant 0 : index
      %42 = vector.load %arg1[%c0_41, %41, %c0_42, %c0_43] : memref<1x28x8x130xf32, #tpu.memory_space<vmem>>, vector<1x1x8x128xf32>
      %43 = vector.shape_cast %42 : vector<1x1x8x128xf32> to vector<8x128xf32>
      %c0_44 = arith.constant 0 : index
      %c3 = arith.constant 3 : index
      %44 = vector.load %arg4[%c0_44, %c3] : memref<8x54xf32, #tpu.memory_space<vmem>>, vector<8x1xf32>
      %45 = vector.broadcast %44 : vector<8x1xf32> to vector<8x128xf32>
      %46 = arith.mulf %43, %45 : vector<8x128xf32>
      %47 = arith.addf %30, %46 : vector<8x128xf32>
      %c0_i32_45 = arith.constant 0 : i32
      %48 = arith.addi %c0_i32_45, %arg13 : i32
      %c1_i32_46 = arith.constant 1 : i32
      %49 = arith.addi %48, %c1_i32_46 : i32
      %50 = arith.index_cast %49 : i32 to index
      %c0_47 = arith.constant 0 : index
      %c0_48 = arith.constant 0 : index
      %51 = vector.load %arg12[%50, %c0_47, %c0_48] : memref<56x8x128xf32, #tpu.memory_space<vmem>>, vector<1x8x128xf32>
      %52 = vector.shape_cast %51 : vector<1x8x128xf32> to vector<8x128xf32>
      %c0_49 = arith.constant 0 : index
      %c4 = arith.constant 4 : index
      %53 = vector.load %arg4[%c0_49, %c4] : memref<8x54xf32, #tpu.memory_space<vmem>>, vector<8x1xf32>
      %54 = vector.broadcast %53 : vector<8x1xf32> to vector<8x128xf32>
      %55 = arith.mulf %52, %54 : vector<8x128xf32>
      %56 = arith.addf %39, %55 : vector<8x128xf32>
      %c28_i32_50 = arith.constant 28 : i32
      %57 = arith.addi %c28_i32_50, %arg13 : i32
      %c1_i32_51 = arith.constant 1 : i32
      %58 = arith.addi %57, %c1_i32_51 : i32
      %59 = arith.index_cast %58 : i32 to index
      %c0_52 = arith.constant 0 : index
      %c0_53 = arith.constant 0 : index
      %60 = vector.load %arg12[%59, %c0_52, %c0_53] : memref<56x8x128xf32, #tpu.memory_space<vmem>>, vector<1x8x128xf32>
      %61 = vector.shape_cast %60 : vector<1x8x128xf32> to vector<8x128xf32>
      %c0_54 = arith.constant 0 : index
      %c5 = arith.constant 5 : index
      %62 = vector.load %arg4[%c0_54, %c5] : memref<8x54xf32, #tpu.memory_space<vmem>>, vector<8x1xf32>
      %63 = vector.broadcast %62 : vector<8x1xf32> to vector<8x128xf32>
      %64 = arith.mulf %61, %63 : vector<8x128xf32>
      %65 = arith.addf %47, %64 : vector<8x128xf32>
      %c2_i32 = arith.constant 2 : i32
      %66 = arith.addi %arg13, %c2_i32 : i32
      %c0_55 = arith.constant 0 : index
      %67 = arith.index_cast %66 : i32 to index
      %c0_56 = arith.constant 0 : index
      %c0_57 = arith.constant 0 : index
      %68 = vector.load %arg1[%c0_55, %67, %c0_56, %c0_57] : memref<1x28x8x130xf32, #tpu.memory_space<vmem>>, vector<1x1x8x128xf32>
      %69 = vector.shape_cast %68 : vector<1x1x8x128xf32> to vector<8x128xf32>
      %c0_58 = arith.constant 0 : index
      %c6 = arith.constant 6 : index
      %70 = vector.load %arg4[%c0_58, %c6] : memref<8x54xf32, #tpu.memory_space<vmem>>, vector<8x1xf32>
      %71 = vector.broadcast %70 : vector<8x1xf32> to vector<8x128xf32>
      %72 = arith.mulf %69, %71 : vector<8x128xf32>
      %73 = arith.addf %56, %72 : vector<8x128xf32>
      %c0_i32_59 = arith.constant 0 : i32
      %74 = arith.addi %c0_i32_59, %arg13 : i32
      %c2_i32_60 = arith.constant 2 : i32
      %75 = arith.addi %74, %c2_i32_60 : i32
      %76 = arith.index_cast %75 : i32 to index
      %c0_61 = arith.constant 0 : index
      %c0_62 = arith.constant 0 : index
      %77 = vector.load %arg12[%76, %c0_61, %c0_62] : memref<56x8x128xf32, #tpu.memory_space<vmem>>, vector<1x8x128xf32>
      %78 = vector.shape_cast %77 : vector<1x8x128xf32> to vector<8x128xf32>
      %c0_63 = arith.constant 0 : index
      %c7 = arith.constant 7 : index
      %79 = vector.load %arg4[%c0_63, %c7] : memref<8x54xf32, #tpu.memory_space<vmem>>, vector<8x1xf32>
      %80 = vector.broadcast %79 : vector<8x1xf32> to vector<8x128xf32>
      %81 = arith.mulf %78, %80 : vector<8x128xf32>
      %82 = arith.addf %65, %81 : vector<8x128xf32>
      %c28_i32_64 = arith.constant 28 : i32
      %83 = arith.addi %c28_i32_64, %arg13 : i32
      %c2_i32_65 = arith.constant 2 : i32
      %84 = arith.addi %83, %c2_i32_65 : i32
      %85 = arith.index_cast %84 : i32 to index
      %c0_66 = arith.constant 0 : index
      %c0_67 = arith.constant 0 : index
      %86 = vector.load %arg12[%85, %c0_66, %c0_67] : memref<56x8x128xf32, #tpu.memory_space<vmem>>, vector<1x8x128xf32>
      %87 = vector.shape_cast %86 : vector<1x8x128xf32> to vector<8x128xf32>
      %c0_68 = arith.constant 0 : index
      %c8 = arith.constant 8 : index
      %88 = vector.load %arg4[%c0_68, %c8] : memref<8x54xf32, #tpu.memory_space<vmem>>, vector<8x1xf32>
      %89 = vector.broadcast %88 : vector<8x1xf32> to vector<8x128xf32>
      %90 = arith.mulf %87, %89 : vector<8x128xf32>
      %91 = arith.addf %73, %90 : vector<8x128xf32>
      %c3_i32 = arith.constant 3 : i32
      %92 = arith.addi %arg13, %c3_i32 : i32
      %c0_69 = arith.constant 0 : index
      %93 = arith.index_cast %92 : i32 to index
      %c0_70 = arith.constant 0 : index
      %c0_71 = arith.constant 0 : index
      %94 = vector.load %arg1[%c0_69, %93, %c0_70, %c0_71] : memref<1x28x8x130xf32, #tpu.memory_space<vmem>>, vector<1x1x8x128xf32>
      %95 = vector.shape_cast %94 : vector<1x1x8x128xf32> to vector<8x128xf32>
      %c0_72 = arith.constant 0 : index
      %c9 = arith.constant 9 : index
      %96 = vector.load %arg4[%c0_72, %c9] : memref<8x54xf32, #tpu.memory_space<vmem>>, vector<8x1xf32>
      %97 = vector.broadcast %96 : vector<8x1xf32> to vector<8x128xf32>
      %98 = arith.mulf %95, %97 : vector<8x128xf32>
      %99 = arith.addf %82, %98 : vector<8x128xf32>
      %c0_73 = arith.constant 0 : index
      %c0_74 = arith.constant 0 : index
      %100 = vector.load %arg3[%c0_73, %c0_74] : memref<8x36xf32, #tpu.memory_space<vmem>>, vector<8x1xf32>
      %101 = vector.broadcast %100 : vector<8x1xf32> to vector<8x128xf32>
      %102 = arith.mulf %95, %101 : vector<8x128xf32>
      %103 = arith.addf %13, %102 : vector<8x128xf32>
      %c0_i32_75 = arith.constant 0 : i32
      %104 = arith.addi %c0_i32_75, %arg13 : i32
      %c3_i32_76 = arith.constant 3 : i32
      %105 = arith.addi %104, %c3_i32_76 : i32
      %106 = arith.index_cast %105 : i32 to index
      %c0_77 = arith.constant 0 : index
      %c0_78 = arith.constant 0 : index
      %107 = vector.load %arg12[%106, %c0_77, %c0_78] : memref<56x8x128xf32, #tpu.memory_space<vmem>>, vector<1x8x128xf32>
      %108 = vector.shape_cast %107 : vector<1x8x128xf32> to vector<8x128xf32>
      %c0_79 = arith.constant 0 : index
      %c10 = arith.constant 10 : index
      %109 = vector.load %arg4[%c0_79, %c10] : memref<8x54xf32, #tpu.memory_space<vmem>>, vector<8x1xf32>
      %110 = vector.broadcast %109 : vector<8x1xf32> to vector<8x128xf32>
      %111 = arith.mulf %108, %110 : vector<8x128xf32>
      %112 = arith.addf %91, %111 : vector<8x128xf32>
      %c0_80 = arith.constant 0 : index
      %c1_81 = arith.constant 1 : index
      %113 = vector.load %arg3[%c0_80, %c1_81] : memref<8x36xf32, #tpu.memory_space<vmem>>, vector<8x1xf32>
      %114 = vector.broadcast %113 : vector<8x1xf32> to vector<8x128xf32>
      %115 = arith.mulf %108, %114 : vector<8x128xf32>
      %116 = arith.addf %13, %115 : vector<8x128xf32>
      %c28_i32_82 = arith.constant 28 : i32
      %117 = arith.addi %c28_i32_82, %arg13 : i32
      %c3_i32_83 = arith.constant 3 : i32
      %118 = arith.addi %117, %c3_i32_83 : i32
      %119 = arith.index_cast %118 : i32 to index
      %c0_84 = arith.constant 0 : index
      %c0_85 = arith.constant 0 : index
      %120 = vector.load %arg12[%119, %c0_84, %c0_85] : memref<56x8x128xf32, #tpu.memory_space<vmem>>, vector<1x8x128xf32>
      %121 = vector.shape_cast %120 : vector<1x8x128xf32> to vector<8x128xf32>
      %c0_86 = arith.constant 0 : index
      %c11 = arith.constant 11 : index
      %122 = vector.load %arg4[%c0_86, %c11] : memref<8x54xf32, #tpu.memory_space<vmem>>, vector<8x1xf32>
      %123 = vector.broadcast %122 : vector<8x1xf32> to vector<8x128xf32>
      %124 = arith.mulf %121, %123 : vector<8x128xf32>
      %125 = arith.addf %99, %124 : vector<8x128xf32>
      %c0_87 = arith.constant 0 : index
      %c2_88 = arith.constant 2 : index
      %126 = vector.load %arg3[%c0_87, %c2_88] : memref<8x36xf32, #tpu.memory_space<vmem>>, vector<8x1xf32>
      %127 = vector.broadcast %126 : vector<8x1xf32> to vector<8x128xf32>
      %128 = arith.mulf %121, %127 : vector<8x128xf32>
      %129 = arith.addf %103, %128 : vector<8x128xf32>
      %c4_i32 = arith.constant 4 : i32
      %130 = arith.addi %arg13, %c4_i32 : i32
      %c0_89 = arith.constant 0 : index
      %131 = arith.index_cast %130 : i32 to index
      %c0_90 = arith.constant 0 : index
      %c0_91 = arith.constant 0 : index
      %132 = vector.load %arg1[%c0_89, %131, %c0_90, %c0_91] : memref<1x28x8x130xf32, #tpu.memory_space<vmem>>, vector<1x1x8x128xf32>
      %133 = vector.shape_cast %132 : vector<1x1x8x128xf32> to vector<8x128xf32>
      %c0_92 = arith.constant 0 : index
      %c12 = arith.constant 12 : index
      %134 = vector.load %arg4[%c0_92, %c12] : memref<8x54xf32, #tpu.memory_space<vmem>>, vector<8x1xf32>
      %135 = vector.broadcast %134 : vector<8x1xf32> to vector<8x128xf32>
      %136 = arith.mulf %133, %135 : vector<8x128xf32>
      %137 = arith.addf %112, %136 : vector<8x128xf32>
      %c0_93 = arith.constant 0 : index
      %c3_94 = arith.constant 3 : index
      %138 = vector.load %arg3[%c0_93, %c3_94] : memref<8x36xf32, #tpu.memory_space<vmem>>, vector<8x1xf32>
      %139 = vector.broadcast %138 : vector<8x1xf32> to vector<8x128xf32>
      %140 = arith.mulf %133, %139 : vector<8x128xf32>
      %141 = arith.addf %116, %140 : vector<8x128xf32>
      %c0_i32_95 = arith.constant 0 : i32
      %142 = arith.addi %c0_i32_95, %arg13 : i32
      %c4_i32_96 = arith.constant 4 : i32
      %143 = arith.addi %142, %c4_i32_96 : i32
      %144 = arith.index_cast %143 : i32 to index
      %c0_97 = arith.constant 0 : index
      %c0_98 = arith.constant 0 : index
      %145 = vector.load %arg12[%144, %c0_97, %c0_98] : memref<56x8x128xf32, #tpu.memory_space<vmem>>, vector<1x8x128xf32>
      %146 = vector.shape_cast %145 : vector<1x8x128xf32> to vector<8x128xf32>
      %c0_99 = arith.constant 0 : index
      %c13 = arith.constant 13 : index
      %147 = vector.load %arg4[%c0_99, %c13] : memref<8x54xf32, #tpu.memory_space<vmem>>, vector<8x1xf32>
      %148 = vector.broadcast %147 : vector<8x1xf32> to vector<8x128xf32>
      %149 = arith.mulf %146, %148 : vector<8x128xf32>
      %150 = arith.addf %125, %149 : vector<8x128xf32>
      %c0_100 = arith.constant 0 : index
      %c4_101 = arith.constant 4 : index
      %151 = vector.load %arg3[%c0_100, %c4_101] : memref<8x36xf32, #tpu.memory_space<vmem>>, vector<8x1xf32>
      %152 = vector.broadcast %151 : vector<8x1xf32> to vector<8x128xf32>
      %153 = arith.mulf %146, %152 : vector<8x128xf32>
      %154 = arith.addf %129, %153 : vector<8x128xf32>
      %c28_i32_102 = arith.constant 28 : i32
      %155 = arith.addi %c28_i32_102, %arg13 : i32
      %c4_i32_103 = arith.constant 4 : i32
      %156 = arith.addi %155, %c4_i32_103 : i32
      %157 = arith.index_cast %156 : i32 to index
      %c0_104 = arith.constant 0 : index
      %c0_105 = arith.constant 0 : index
      %158 = vector.load %arg12[%157, %c0_104, %c0_105] : memref<56x8x128xf32, #tpu.memory_space<vmem>>, vector<1x8x128xf32>
      %159 = vector.shape_cast %158 : vector<1x8x128xf32> to vector<8x128xf32>
      %c0_106 = arith.constant 0 : index
      %c14 = arith.constant 14 : index
      %160 = vector.load %arg4[%c0_106, %c14] : memref<8x54xf32, #tpu.memory_space<vmem>>, vector<8x1xf32>
      %161 = vector.broadcast %160 : vector<8x1xf32> to vector<8x128xf32>
      %162 = arith.mulf %159, %161 : vector<8x128xf32>
      %163 = arith.addf %137, %162 : vector<8x128xf32>
      %c0_107 = arith.constant 0 : index
      %c5_108 = arith.constant 5 : index
      %164 = vector.load %arg3[%c0_107, %c5_108] : memref<8x36xf32, #tpu.memory_space<vmem>>, vector<8x1xf32>
      %165 = vector.broadcast %164 : vector<8x1xf32> to vector<8x128xf32>
      %166 = arith.mulf %159, %165 : vector<8x128xf32>
      %167 = arith.addf %141, %166 : vector<8x128xf32>
      %c5_i32 = arith.constant 5 : i32
      %168 = arith.addi %arg13, %c5_i32 : i32
      %c0_109 = arith.constant 0 : index
      %169 = arith.index_cast %168 : i32 to index
      %c0_110 = arith.constant 0 : index
      %c0_111 = arith.constant 0 : index
      %170 = vector.load %arg1[%c0_109, %169, %c0_110, %c0_111] : memref<1x28x8x130xf32, #tpu.memory_space<vmem>>, vector<1x1x8x128xf32>
      %171 = vector.shape_cast %170 : vector<1x1x8x128xf32> to vector<8x128xf32>
      %c0_112 = arith.constant 0 : index
      %c15 = arith.constant 15 : index
      %172 = vector.load %arg4[%c0_112, %c15] : memref<8x54xf32, #tpu.memory_space<vmem>>, vector<8x1xf32>
      %173 = vector.broadcast %172 : vector<8x1xf32> to vector<8x128xf32>
      %174 = arith.mulf %171, %173 : vector<8x128xf32>
      %175 = arith.addf %150, %174 : vector<8x128xf32>
      %c0_113 = arith.constant 0 : index
      %c6_114 = arith.constant 6 : index
      %176 = vector.load %arg3[%c0_113, %c6_114] : memref<8x36xf32, #tpu.memory_space<vmem>>, vector<8x1xf32>
      %177 = vector.broadcast %176 : vector<8x1xf32> to vector<8x128xf32>
      %178 = arith.mulf %171, %177 : vector<8x128xf32>
      %179 = arith.addf %154, %178 : vector<8x128xf32>
      %c0_i32_115 = arith.constant 0 : i32
      %180 = arith.addi %c0_i32_115, %arg13 : i32
      %c5_i32_116 = arith.constant 5 : i32
      %181 = arith.addi %180, %c5_i32_116 : i32
      %182 = arith.index_cast %181 : i32 to index
      %c0_117 = arith.constant 0 : index
      %c0_118 = arith.constant 0 : index
      %183 = vector.load %arg12[%182, %c0_117, %c0_118] : memref<56x8x128xf32, #tpu.memory_space<vmem>>, vector<1x8x128xf32>
      %184 = vector.shape_cast %183 : vector<1x8x128xf32> to vector<8x128xf32>
      %c0_119 = arith.constant 0 : index
      %c16 = arith.constant 16 : index
      %185 = vector.load %arg4[%c0_119, %c16] : memref<8x54xf32, #tpu.memory_space<vmem>>, vector<8x1xf32>
      %186 = vector.broadcast %185 : vector<8x1xf32> to vector<8x128xf32>
      %187 = arith.mulf %184, %186 : vector<8x128xf32>
      %188 = arith.addf %163, %187 : vector<8x128xf32>
      %c0_120 = arith.constant 0 : index
      %c7_121 = arith.constant 7 : index
      %189 = vector.load %arg3[%c0_120, %c7_121] : memref<8x36xf32, #tpu.memory_space<vmem>>, vector<8x1xf32>
      %190 = vector.broadcast %189 : vector<8x1xf32> to vector<8x128xf32>
      %191 = arith.mulf %184, %190 : vector<8x128xf32>
      %192 = arith.addf %167, %191 : vector<8x128xf32>
      %c28_i32_122 = arith.constant 28 : i32
      %193 = arith.addi %c28_i32_122, %arg13 : i32
      %c5_i32_123 = arith.constant 5 : i32
      %194 = arith.addi %193, %c5_i32_123 : i32
      %195 = arith.index_cast %194 : i32 to index
      %c0_124 = arith.constant 0 : index
      %c0_125 = arith.constant 0 : index
      %196 = vector.load %arg12[%195, %c0_124, %c0_125] : memref<56x8x128xf32, #tpu.memory_space<vmem>>, vector<1x8x128xf32>
      %197 = vector.shape_cast %196 : vector<1x8x128xf32> to vector<8x128xf32>
      %c0_126 = arith.constant 0 : index
      %c17 = arith.constant 17 : index
      %198 = vector.load %arg4[%c0_126, %c17] : memref<8x54xf32, #tpu.memory_space<vmem>>, vector<8x1xf32>
      %199 = vector.broadcast %198 : vector<8x1xf32> to vector<8x128xf32>
      %200 = arith.mulf %197, %199 : vector<8x128xf32>
      %201 = arith.addf %175, %200 : vector<8x128xf32>
      %c0_127 = arith.constant 0 : index
      %c8_128 = arith.constant 8 : index
      %202 = vector.load %arg3[%c0_127, %c8_128] : memref<8x36xf32, #tpu.memory_space<vmem>>, vector<8x1xf32>
      %203 = vector.broadcast %202 : vector<8x1xf32> to vector<8x128xf32>
      %204 = arith.mulf %197, %203 : vector<8x128xf32>
      %205 = arith.addf %179, %204 : vector<8x128xf32>
      %c6_i32 = arith.constant 6 : i32
      %206 = arith.addi %arg13, %c6_i32 : i32
      %c0_129 = arith.constant 0 : index
      %207 = arith.index_cast %206 : i32 to index
      %c0_130 = arith.constant 0 : index
      %c0_131 = arith.constant 0 : index
      %208 = vector.load %arg1[%c0_129, %207, %c0_130, %c0_131] : memref<1x28x8x130xf32, #tpu.memory_space<vmem>>, vector<1x1x8x128xf32>
      %209 = vector.shape_cast %208 : vector<1x1x8x128xf32> to vector<8x128xf32>
      %c0_132 = arith.constant 0 : index
      %c18 = arith.constant 18 : index
      %210 = vector.load %arg4[%c0_132, %c18] : memref<8x54xf32, #tpu.memory_space<vmem>>, vector<8x1xf32>
      %211 = vector.broadcast %210 : vector<8x1xf32> to vector<8x128xf32>
      %212 = arith.mulf %209, %211 : vector<8x128xf32>
      %213 = arith.addf %188, %212 : vector<8x128xf32>
      %c0_133 = arith.constant 0 : index
      %c9_134 = arith.constant 9 : index
      %214 = vector.load %arg3[%c0_133, %c9_134] : memref<8x36xf32, #tpu.memory_space<vmem>>, vector<8x1xf32>
      %215 = vector.broadcast %214 : vector<8x1xf32> to vector<8x128xf32>
      %216 = arith.mulf %209, %215 : vector<8x128xf32>
      %217 = arith.addf %192, %216 : vector<8x128xf32>
      %c0_135 = arith.constant 0 : index
      %c0_136 = arith.constant 0 : index
      %218 = vector.load %arg2[%c0_135, %c0_136] : memref<8x18xf32, #tpu.memory_space<vmem>>, vector<8x1xf32>
      %219 = vector.broadcast %218 : vector<8x1xf32> to vector<8x128xf32>
      %220 = arith.mulf %209, %219 : vector<8x128xf32>
      %221 = arith.addf %13, %220 : vector<8x128xf32>
      %c0_i32_137 = arith.constant 0 : i32
      %222 = arith.addi %c0_i32_137, %arg13 : i32
      %c6_i32_138 = arith.constant 6 : i32
      %223 = arith.addi %222, %c6_i32_138 : i32
      %224 = arith.index_cast %223 : i32 to index
      %c0_139 = arith.constant 0 : index
      %c0_140 = arith.constant 0 : index
      %225 = vector.load %arg12[%224, %c0_139, %c0_140] : memref<56x8x128xf32, #tpu.memory_space<vmem>>, vector<1x8x128xf32>
      %226 = vector.shape_cast %225 : vector<1x8x128xf32> to vector<8x128xf32>
      %c0_141 = arith.constant 0 : index
      %c19 = arith.constant 19 : index
      %227 = vector.load %arg4[%c0_141, %c19] : memref<8x54xf32, #tpu.memory_space<vmem>>, vector<8x1xf32>
      %228 = vector.broadcast %227 : vector<8x1xf32> to vector<8x128xf32>
      %229 = arith.mulf %226, %228 : vector<8x128xf32>
      %230 = arith.addf %201, %229 : vector<8x128xf32>
      %c0_142 = arith.constant 0 : index
      %c10_143 = arith.constant 10 : index
      %231 = vector.load %arg3[%c0_142, %c10_143] : memref<8x36xf32, #tpu.memory_space<vmem>>, vector<8x1xf32>
      %232 = vector.broadcast %231 : vector<8x1xf32> to vector<8x128xf32>
      %233 = arith.mulf %226, %232 : vector<8x128xf32>
      %234 = arith.addf %205, %233 : vector<8x128xf32>
      %c0_144 = arith.constant 0 : index
      %c1_145 = arith.constant 1 : index
      %235 = vector.load %arg2[%c0_144, %c1_145] : memref<8x18xf32, #tpu.memory_space<vmem>>, vector<8x1xf32>
      %236 = vector.broadcast %235 : vector<8x1xf32> to vector<8x128xf32>
      %237 = arith.mulf %226, %236 : vector<8x128xf32>
      %238 = arith.addf %221, %237 : vector<8x128xf32>
      %239 = arith.maximumf %209, %226 : vector<8x128xf32>
      %c28_i32_146 = arith.constant 28 : i32
      %240 = arith.addi %c28_i32_146, %arg13 : i32
      %c6_i32_147 = arith.constant 6 : i32
      %241 = arith.addi %240, %c6_i32_147 : i32
      %242 = arith.index_cast %241 : i32 to index
      %c0_148 = arith.constant 0 : index
      %c0_149 = arith.constant 0 : index
      %243 = vector.load %arg12[%242, %c0_148, %c0_149] : memref<56x8x128xf32, #tpu.memory_space<vmem>>, vector<1x8x128xf32>
      %244 = vector.shape_cast %243 : vector<1x8x128xf32> to vector<8x128xf32>
      %c0_150 = arith.constant 0 : index
      %c20 = arith.constant 20 : index
      %245 = vector.load %arg4[%c0_150, %c20] : memref<8x54xf32, #tpu.memory_space<vmem>>, vector<8x1xf32>
      %246 = vector.broadcast %245 : vector<8x1xf32> to vector<8x128xf32>
      %247 = arith.mulf %244, %246 : vector<8x128xf32>
      %248 = arith.addf %213, %247 : vector<8x128xf32>
      %c0_151 = arith.constant 0 : index
      %c11_152 = arith.constant 11 : index
      %249 = vector.load %arg3[%c0_151, %c11_152] : memref<8x36xf32, #tpu.memory_space<vmem>>, vector<8x1xf32>
      %250 = vector.broadcast %249 : vector<8x1xf32> to vector<8x128xf32>
      %251 = arith.mulf %244, %250 : vector<8x128xf32>
      %252 = arith.addf %217, %251 : vector<8x128xf32>
      %c0_153 = arith.constant 0 : index
      %c2_154 = arith.constant 2 : index
      %253 = vector.load %arg2[%c0_153, %c2_154] : memref<8x18xf32, #tpu.memory_space<vmem>>, vector<8x1xf32>
      %254 = vector.broadcast %253 : vector<8x1xf32> to vector<8x128xf32>
      %255 = arith.mulf %244, %254 : vector<8x128xf32>
      %256 = arith.addf %238, %255 : vector<8x128xf32>
      %257 = arith.maximumf %239, %244 : vector<8x128xf32>
      %c7_i32 = arith.constant 7 : i32
      %258 = arith.addi %arg13, %c7_i32 : i32
      %c0_155 = arith.constant 0 : index
      %259 = arith.index_cast %258 : i32 to index
      %c0_156 = arith.constant 0 : index
      %c0_157 = arith.constant 0 : index
      %260 = vector.load %arg1[%c0_155, %259, %c0_156, %c0_157] : memref<1x28x8x130xf32, #tpu.memory_space<vmem>>, vector<1x1x8x128xf32>
      %261 = vector.shape_cast %260 : vector<1x1x8x128xf32> to vector<8x128xf32>
      %c0_158 = arith.constant 0 : index
      %c21 = arith.constant 21 : index
      %262 = vector.load %arg4[%c0_158, %c21] : memref<8x54xf32, #tpu.memory_space<vmem>>, vector<8x1xf32>
      %263 = vector.broadcast %262 : vector<8x1xf32> to vector<8x128xf32>
      %264 = arith.mulf %261, %263 : vector<8x128xf32>
      %265 = arith.addf %230, %264 : vector<8x128xf32>
      %c0_159 = arith.constant 0 : index
      %c12_160 = arith.constant 12 : index
      %266 = vector.load %arg3[%c0_159, %c12_160] : memref<8x36xf32, #tpu.memory_space<vmem>>, vector<8x1xf32>
      %267 = vector.broadcast %266 : vector<8x1xf32> to vector<8x128xf32>
      %268 = arith.mulf %261, %267 : vector<8x128xf32>
      %269 = arith.addf %234, %268 : vector<8x128xf32>
      %c0_161 = arith.constant 0 : index
      %c3_162 = arith.constant 3 : index
      %270 = vector.load %arg2[%c0_161, %c3_162] : memref<8x18xf32, #tpu.memory_space<vmem>>, vector<8x1xf32>
      %271 = vector.broadcast %270 : vector<8x1xf32> to vector<8x128xf32>
      %272 = arith.mulf %261, %271 : vector<8x128xf32>
      %273 = arith.addf %256, %272 : vector<8x128xf32>
      %274 = arith.maximumf %257, %261 : vector<8x128xf32>
      %c0_i32_163 = arith.constant 0 : i32
      %275 = arith.addi %c0_i32_163, %arg13 : i32
      %c7_i32_164 = arith.constant 7 : i32
      %276 = arith.addi %275, %c7_i32_164 : i32
      %277 = arith.index_cast %276 : i32 to index
      %c0_165 = arith.constant 0 : index
      %c0_166 = arith.constant 0 : index
      %278 = vector.load %arg12[%277, %c0_165, %c0_166] : memref<56x8x128xf32, #tpu.memory_space<vmem>>, vector<1x8x128xf32>
      %279 = vector.shape_cast %278 : vector<1x8x128xf32> to vector<8x128xf32>
      %c0_167 = arith.constant 0 : index
      %c22 = arith.constant 22 : index
      %280 = vector.load %arg4[%c0_167, %c22] : memref<8x54xf32, #tpu.memory_space<vmem>>, vector<8x1xf32>
      %281 = vector.broadcast %280 : vector<8x1xf32> to vector<8x128xf32>
      %282 = arith.mulf %279, %281 : vector<8x128xf32>
      %283 = arith.addf %248, %282 : vector<8x128xf32>
      %c0_168 = arith.constant 0 : index
      %c13_169 = arith.constant 13 : index
      %284 = vector.load %arg3[%c0_168, %c13_169] : memref<8x36xf32, #tpu.memory_space<vmem>>, vector<8x1xf32>
      %285 = vector.broadcast %284 : vector<8x1xf32> to vector<8x128xf32>
      %286 = arith.mulf %279, %285 : vector<8x128xf32>
      %287 = arith.addf %252, %286 : vector<8x128xf32>
      %c0_170 = arith.constant 0 : index
      %c4_171 = arith.constant 4 : index
      %288 = vector.load %arg2[%c0_170, %c4_171] : memref<8x18xf32, #tpu.memory_space<vmem>>, vector<8x1xf32>
      %289 = vector.broadcast %288 : vector<8x1xf32> to vector<8x128xf32>
      %290 = arith.mulf %279, %289 : vector<8x128xf32>
      %291 = arith.addf %273, %290 : vector<8x128xf32>
      %292 = arith.maximumf %274, %279 : vector<8x128xf32>
      %c28_i32_172 = arith.constant 28 : i32
      %293 = arith.addi %c28_i32_172, %arg13 : i32
      %c7_i32_173 = arith.constant 7 : i32
      %294 = arith.addi %293, %c7_i32_173 : i32
      %295 = arith.index_cast %294 : i32 to index
      %c0_174 = arith.constant 0 : index
      %c0_175 = arith.constant 0 : index
      %296 = vector.load %arg12[%295, %c0_174, %c0_175] : memref<56x8x128xf32, #tpu.memory_space<vmem>>, vector<1x8x128xf32>
      %297 = vector.shape_cast %296 : vector<1x8x128xf32> to vector<8x128xf32>
      %c0_176 = arith.constant 0 : index
      %c23 = arith.constant 23 : index
      %298 = vector.load %arg4[%c0_176, %c23] : memref<8x54xf32, #tpu.memory_space<vmem>>, vector<8x1xf32>
      %299 = vector.broadcast %298 : vector<8x1xf32> to vector<8x128xf32>
      %300 = arith.mulf %297, %299 : vector<8x128xf32>
      %301 = arith.addf %265, %300 : vector<8x128xf32>
      %c0_177 = arith.constant 0 : index
      %c14_178 = arith.constant 14 : index
      %302 = vector.load %arg3[%c0_177, %c14_178] : memref<8x36xf32, #tpu.memory_space<vmem>>, vector<8x1xf32>
      %303 = vector.broadcast %302 : vector<8x1xf32> to vector<8x128xf32>
      %304 = arith.mulf %297, %303 : vector<8x128xf32>
      %305 = arith.addf %269, %304 : vector<8x128xf32>
      %c0_179 = arith.constant 0 : index
      %c5_180 = arith.constant 5 : index
      %306 = vector.load %arg2[%c0_179, %c5_180] : memref<8x18xf32, #tpu.memory_space<vmem>>, vector<8x1xf32>
      %307 = vector.broadcast %306 : vector<8x1xf32> to vector<8x128xf32>
      %308 = arith.mulf %297, %307 : vector<8x128xf32>
      %309 = arith.addf %291, %308 : vector<8x128xf32>
      %310 = arith.maximumf %292, %297 : vector<8x128xf32>
      %c8_i32 = arith.constant 8 : i32
      %311 = arith.addi %arg13, %c8_i32 : i32
      %c0_181 = arith.constant 0 : index
      %312 = arith.index_cast %311 : i32 to index
      %c0_182 = arith.constant 0 : index
      %c0_183 = arith.constant 0 : index
      %313 = vector.load %arg1[%c0_181, %312, %c0_182, %c0_183] : memref<1x28x8x130xf32, #tpu.memory_space<vmem>>, vector<1x1x8x128xf32>
      %314 = vector.shape_cast %313 : vector<1x1x8x128xf32> to vector<8x128xf32>
      %c0_184 = arith.constant 0 : index
      %c24 = arith.constant 24 : index
      %315 = vector.load %arg4[%c0_184, %c24] : memref<8x54xf32, #tpu.memory_space<vmem>>, vector<8x1xf32>
      %316 = vector.broadcast %315 : vector<8x1xf32> to vector<8x128xf32>
      %317 = arith.mulf %314, %316 : vector<8x128xf32>
      %318 = arith.addf %283, %317 : vector<8x128xf32>
      %c0_185 = arith.constant 0 : index
      %c15_186 = arith.constant 15 : index
      %319 = vector.load %arg3[%c0_185, %c15_186] : memref<8x36xf32, #tpu.memory_space<vmem>>, vector<8x1xf32>
      %320 = vector.broadcast %319 : vector<8x1xf32> to vector<8x128xf32>
      %321 = arith.mulf %314, %320 : vector<8x128xf32>
      %322 = arith.addf %287, %321 : vector<8x128xf32>
      %c0_187 = arith.constant 0 : index
      %c6_188 = arith.constant 6 : index
      %323 = vector.load %arg2[%c0_187, %c6_188] : memref<8x18xf32, #tpu.memory_space<vmem>>, vector<8x1xf32>
      %324 = vector.broadcast %323 : vector<8x1xf32> to vector<8x128xf32>
      %325 = arith.mulf %314, %324 : vector<8x128xf32>
      %326 = arith.addf %309, %325 : vector<8x128xf32>
      %327 = arith.maximumf %310, %314 : vector<8x128xf32>
      %c0_i32_189 = arith.constant 0 : i32
      %328 = arith.addi %c0_i32_189, %arg13 : i32
      %c8_i32_190 = arith.constant 8 : i32
      %329 = arith.addi %328, %c8_i32_190 : i32
      %330 = arith.index_cast %329 : i32 to index
      %c0_191 = arith.constant 0 : index
      %c0_192 = arith.constant 0 : index
      %331 = vector.load %arg12[%330, %c0_191, %c0_192] : memref<56x8x128xf32, #tpu.memory_space<vmem>>, vector<1x8x128xf32>
      %332 = vector.shape_cast %331 : vector<1x8x128xf32> to vector<8x128xf32>
      %c0_193 = arith.constant 0 : index
      %c25 = arith.constant 25 : index
      %333 = vector.load %arg4[%c0_193, %c25] : memref<8x54xf32, #tpu.memory_space<vmem>>, vector<8x1xf32>
      %334 = vector.broadcast %333 : vector<8x1xf32> to vector<8x128xf32>
      %335 = arith.mulf %332, %334 : vector<8x128xf32>
      %336 = arith.addf %301, %335 : vector<8x128xf32>
      %c0_194 = arith.constant 0 : index
      %c16_195 = arith.constant 16 : index
      %337 = vector.load %arg3[%c0_194, %c16_195] : memref<8x36xf32, #tpu.memory_space<vmem>>, vector<8x1xf32>
      %338 = vector.broadcast %337 : vector<8x1xf32> to vector<8x128xf32>
      %339 = arith.mulf %332, %338 : vector<8x128xf32>
      %340 = arith.addf %305, %339 : vector<8x128xf32>
      %c0_196 = arith.constant 0 : index
      %c7_197 = arith.constant 7 : index
      %341 = vector.load %arg2[%c0_196, %c7_197] : memref<8x18xf32, #tpu.memory_space<vmem>>, vector<8x1xf32>
      %342 = vector.broadcast %341 : vector<8x1xf32> to vector<8x128xf32>
      %343 = arith.mulf %332, %342 : vector<8x128xf32>
      %344 = arith.addf %326, %343 : vector<8x128xf32>
      %345 = arith.maximumf %327, %332 : vector<8x128xf32>
      %c28_i32_198 = arith.constant 28 : i32
      %346 = arith.addi %c28_i32_198, %arg13 : i32
      %c8_i32_199 = arith.constant 8 : i32
      %347 = arith.addi %346, %c8_i32_199 : i32
      %348 = arith.index_cast %347 : i32 to index
      %c0_200 = arith.constant 0 : index
      %c0_201 = arith.constant 0 : index
      %349 = vector.load %arg12[%348, %c0_200, %c0_201] : memref<56x8x128xf32, #tpu.memory_space<vmem>>, vector<1x8x128xf32>
      %350 = vector.shape_cast %349 : vector<1x8x128xf32> to vector<8x128xf32>
      %c0_202 = arith.constant 0 : index
      %c26 = arith.constant 26 : index
      %351 = vector.load %arg4[%c0_202, %c26] : memref<8x54xf32, #tpu.memory_space<vmem>>, vector<8x1xf32>
      %352 = vector.broadcast %351 : vector<8x1xf32> to vector<8x128xf32>
      %353 = arith.mulf %350, %352 : vector<8x128xf32>
      %354 = arith.addf %318, %353 : vector<8x128xf32>
      %c0_203 = arith.constant 0 : index
      %c17_204 = arith.constant 17 : index
      %355 = vector.load %arg3[%c0_203, %c17_204] : memref<8x36xf32, #tpu.memory_space<vmem>>, vector<8x1xf32>
      %356 = vector.broadcast %355 : vector<8x1xf32> to vector<8x128xf32>
      %357 = arith.mulf %350, %356 : vector<8x128xf32>
      %358 = arith.addf %322, %357 : vector<8x128xf32>
      %c0_205 = arith.constant 0 : index
      %c8_206 = arith.constant 8 : index
      %359 = vector.load %arg2[%c0_205, %c8_206] : memref<8x18xf32, #tpu.memory_space<vmem>>, vector<8x1xf32>
      %360 = vector.broadcast %359 : vector<8x1xf32> to vector<8x128xf32>
      %361 = arith.mulf %350, %360 : vector<8x128xf32>
      %362 = arith.addf %344, %361 : vector<8x128xf32>
      %363 = arith.maximumf %345, %350 : vector<8x128xf32>
      %c9_i32 = arith.constant 9 : i32
      %364 = arith.addi %arg13, %c9_i32 : i32
      %c0_207 = arith.constant 0 : index
      %365 = arith.index_cast %364 : i32 to index
      %c0_208 = arith.constant 0 : index
      %c0_209 = arith.constant 0 : index
      %366 = vector.load %arg1[%c0_207, %365, %c0_208, %c0_209] : memref<1x28x8x130xf32, #tpu.memory_space<vmem>>, vector<1x1x8x128xf32>
      %367 = vector.shape_cast %366 : vector<1x1x8x128xf32> to vector<8x128xf32>
      %c0_210 = arith.constant 0 : index
      %c27 = arith.constant 27 : index
      %368 = vector.load %arg4[%c0_210, %c27] : memref<8x54xf32, #tpu.memory_space<vmem>>, vector<8x1xf32>
      %369 = vector.broadcast %368 : vector<8x1xf32> to vector<8x128xf32>
      %370 = arith.mulf %367, %369 : vector<8x128xf32>
      %371 = arith.addf %336, %370 : vector<8x128xf32>
      %c0_211 = arith.constant 0 : index
      %c18_212 = arith.constant 18 : index
      %372 = vector.load %arg3[%c0_211, %c18_212] : memref<8x36xf32, #tpu.memory_space<vmem>>, vector<8x1xf32>
      %373 = vector.broadcast %372 : vector<8x1xf32> to vector<8x128xf32>
      %374 = arith.mulf %367, %373 : vector<8x128xf32>
      %375 = arith.addf %340, %374 : vector<8x128xf32>
      %c0_213 = arith.constant 0 : index
      %c9_214 = arith.constant 9 : index
      %376 = vector.load %arg2[%c0_213, %c9_214] : memref<8x18xf32, #tpu.memory_space<vmem>>, vector<8x1xf32>
      %377 = vector.broadcast %376 : vector<8x1xf32> to vector<8x128xf32>
      %378 = arith.mulf %367, %377 : vector<8x128xf32>
      %379 = arith.addf %362, %378 : vector<8x128xf32>
      %380 = arith.maximumf %363, %367 : vector<8x128xf32>
      %c0_i32_215 = arith.constant 0 : i32
      %381 = arith.addi %c0_i32_215, %arg13 : i32
      %c9_i32_216 = arith.constant 9 : i32
      %382 = arith.addi %381, %c9_i32_216 : i32
      %383 = arith.index_cast %382 : i32 to index
      %c0_217 = arith.constant 0 : index
      %c0_218 = arith.constant 0 : index
      %384 = vector.load %arg12[%383, %c0_217, %c0_218] : memref<56x8x128xf32, #tpu.memory_space<vmem>>, vector<1x8x128xf32>
      %385 = vector.shape_cast %384 : vector<1x8x128xf32> to vector<8x128xf32>
      %c0_219 = arith.constant 0 : index
      %c28_220 = arith.constant 28 : index
      %386 = vector.load %arg4[%c0_219, %c28_220] : memref<8x54xf32, #tpu.memory_space<vmem>>, vector<8x1xf32>
      %387 = vector.broadcast %386 : vector<8x1xf32> to vector<8x128xf32>
      %388 = arith.mulf %385, %387 : vector<8x128xf32>
      %389 = arith.addf %354, %388 : vector<8x128xf32>
      %c0_221 = arith.constant 0 : index
      %c19_222 = arith.constant 19 : index
      %390 = vector.load %arg3[%c0_221, %c19_222] : memref<8x36xf32, #tpu.memory_space<vmem>>, vector<8x1xf32>
      %391 = vector.broadcast %390 : vector<8x1xf32> to vector<8x128xf32>
      %392 = arith.mulf %385, %391 : vector<8x128xf32>
      %393 = arith.addf %358, %392 : vector<8x128xf32>
      %c0_223 = arith.constant 0 : index
      %c10_224 = arith.constant 10 : index
      %394 = vector.load %arg2[%c0_223, %c10_224] : memref<8x18xf32, #tpu.memory_space<vmem>>, vector<8x1xf32>
      %395 = vector.broadcast %394 : vector<8x1xf32> to vector<8x128xf32>
      %396 = arith.mulf %385, %395 : vector<8x128xf32>
      %397 = arith.addf %379, %396 : vector<8x128xf32>
      %398 = arith.maximumf %380, %385 : vector<8x128xf32>
      %c28_i32_225 = arith.constant 28 : i32
      %399 = arith.addi %c28_i32_225, %arg13 : i32
      %c9_i32_226 = arith.constant 9 : i32
      %400 = arith.addi %399, %c9_i32_226 : i32
      %401 = arith.index_cast %400 : i32 to index
      %c0_227 = arith.constant 0 : index
      %c0_228 = arith.constant 0 : index
      %402 = vector.load %arg12[%401, %c0_227, %c0_228] : memref<56x8x128xf32, #tpu.memory_space<vmem>>, vector<1x8x128xf32>
      %403 = vector.shape_cast %402 : vector<1x8x128xf32> to vector<8x128xf32>
      %c0_229 = arith.constant 0 : index
      %c29 = arith.constant 29 : index
      %404 = vector.load %arg4[%c0_229, %c29] : memref<8x54xf32, #tpu.memory_space<vmem>>, vector<8x1xf32>
      %405 = vector.broadcast %404 : vector<8x1xf32> to vector<8x128xf32>
      %406 = arith.mulf %403, %405 : vector<8x128xf32>
      %407 = arith.addf %371, %406 : vector<8x128xf32>
      %c0_230 = arith.constant 0 : index
      %c20_231 = arith.constant 20 : index
      %408 = vector.load %arg3[%c0_230, %c20_231] : memref<8x36xf32, #tpu.memory_space<vmem>>, vector<8x1xf32>
      %409 = vector.broadcast %408 : vector<8x1xf32> to vector<8x128xf32>
      %410 = arith.mulf %403, %409 : vector<8x128xf32>
      %411 = arith.addf %375, %410 : vector<8x128xf32>
      %c0_232 = arith.constant 0 : index
      %c11_233 = arith.constant 11 : index
      %412 = vector.load %arg2[%c0_232, %c11_233] : memref<8x18xf32, #tpu.memory_space<vmem>>, vector<8x1xf32>
      %413 = vector.broadcast %412 : vector<8x1xf32> to vector<8x128xf32>
      %414 = arith.mulf %403, %413 : vector<8x128xf32>
      %415 = arith.addf %397, %414 : vector<8x128xf32>
      %416 = arith.maximumf %398, %403 : vector<8x128xf32>
      %c10_i32 = arith.constant 10 : i32
      %417 = arith.addi %arg13, %c10_i32 : i32
      %c0_234 = arith.constant 0 : index
      %418 = arith.index_cast %417 : i32 to index
      %c0_235 = arith.constant 0 : index
      %c0_236 = arith.constant 0 : index
      %419 = vector.load %arg1[%c0_234, %418, %c0_235, %c0_236] : memref<1x28x8x130xf32, #tpu.memory_space<vmem>>, vector<1x1x8x128xf32>
      %420 = vector.shape_cast %419 : vector<1x1x8x128xf32> to vector<8x128xf32>
      %c0_237 = arith.constant 0 : index
      %c30 = arith.constant 30 : index
      %421 = vector.load %arg4[%c0_237, %c30] : memref<8x54xf32, #tpu.memory_space<vmem>>, vector<8x1xf32>
      %422 = vector.broadcast %421 : vector<8x1xf32> to vector<8x128xf32>
      %423 = arith.mulf %420, %422 : vector<8x128xf32>
      %424 = arith.addf %389, %423 : vector<8x128xf32>
      %c0_238 = arith.constant 0 : index
      %c21_239 = arith.constant 21 : index
      %425 = vector.load %arg3[%c0_238, %c21_239] : memref<8x36xf32, #tpu.memory_space<vmem>>, vector<8x1xf32>
      %426 = vector.broadcast %425 : vector<8x1xf32> to vector<8x128xf32>
      %427 = arith.mulf %420, %426 : vector<8x128xf32>
      %428 = arith.addf %393, %427 : vector<8x128xf32>
      %c0_240 = arith.constant 0 : index
      %c12_241 = arith.constant 12 : index
      %429 = vector.load %arg2[%c0_240, %c12_241] : memref<8x18xf32, #tpu.memory_space<vmem>>, vector<8x1xf32>
      %430 = vector.broadcast %429 : vector<8x1xf32> to vector<8x128xf32>
      %431 = arith.mulf %420, %430 : vector<8x128xf32>
      %432 = arith.addf %415, %431 : vector<8x128xf32>
      %433 = arith.maximumf %416, %420 : vector<8x128xf32>
      %c0_i32_242 = arith.constant 0 : i32
      %434 = arith.addi %c0_i32_242, %arg13 : i32
      %c10_i32_243 = arith.constant 10 : i32
      %435 = arith.addi %434, %c10_i32_243 : i32
      %436 = arith.index_cast %435 : i32 to index
      %c0_244 = arith.constant 0 : index
      %c0_245 = arith.constant 0 : index
      %437 = vector.load %arg12[%436, %c0_244, %c0_245] : memref<56x8x128xf32, #tpu.memory_space<vmem>>, vector<1x8x128xf32>
      %438 = vector.shape_cast %437 : vector<1x8x128xf32> to vector<8x128xf32>
      %c0_246 = arith.constant 0 : index
      %c31 = arith.constant 31 : index
      %439 = vector.load %arg4[%c0_246, %c31] : memref<8x54xf32, #tpu.memory_space<vmem>>, vector<8x1xf32>
      %440 = vector.broadcast %439 : vector<8x1xf32> to vector<8x128xf32>
      %441 = arith.mulf %438, %440 : vector<8x128xf32>
      %442 = arith.addf %407, %441 : vector<8x128xf32>
      %c0_247 = arith.constant 0 : index
      %c22_248 = arith.constant 22 : index
      %443 = vector.load %arg3[%c0_247, %c22_248] : memref<8x36xf32, #tpu.memory_space<vmem>>, vector<8x1xf32>
      %444 = vector.broadcast %443 : vector<8x1xf32> to vector<8x128xf32>
      %445 = arith.mulf %438, %444 : vector<8x128xf32>
      %446 = arith.addf %411, %445 : vector<8x128xf32>
      %c0_249 = arith.constant 0 : index
      %c13_250 = arith.constant 13 : index
      %447 = vector.load %arg2[%c0_249, %c13_250] : memref<8x18xf32, #tpu.memory_space<vmem>>, vector<8x1xf32>
      %448 = vector.broadcast %447 : vector<8x1xf32> to vector<8x128xf32>
      %449 = arith.mulf %438, %448 : vector<8x128xf32>
      %450 = arith.addf %432, %449 : vector<8x128xf32>
      %451 = arith.maximumf %433, %438 : vector<8x128xf32>
      %c28_i32_251 = arith.constant 28 : i32
      %452 = arith.addi %c28_i32_251, %arg13 : i32
      %c10_i32_252 = arith.constant 10 : i32
      %453 = arith.addi %452, %c10_i32_252 : i32
      %454 = arith.index_cast %453 : i32 to index
      %c0_253 = arith.constant 0 : index
      %c0_254 = arith.constant 0 : index
      %455 = vector.load %arg12[%454, %c0_253, %c0_254] : memref<56x8x128xf32, #tpu.memory_space<vmem>>, vector<1x8x128xf32>
      %456 = vector.shape_cast %455 : vector<1x8x128xf32> to vector<8x128xf32>
      %c0_255 = arith.constant 0 : index
      %c32 = arith.constant 32 : index
      %457 = vector.load %arg4[%c0_255, %c32] : memref<8x54xf32, #tpu.memory_space<vmem>>, vector<8x1xf32>
      %458 = vector.broadcast %457 : vector<8x1xf32> to vector<8x128xf32>
      %459 = arith.mulf %456, %458 : vector<8x128xf32>
      %460 = arith.addf %424, %459 : vector<8x128xf32>
      %c0_256 = arith.constant 0 : index
      %c23_257 = arith.constant 23 : index
      %461 = vector.load %arg3[%c0_256, %c23_257] : memref<8x36xf32, #tpu.memory_space<vmem>>, vector<8x1xf32>
      %462 = vector.broadcast %461 : vector<8x1xf32> to vector<8x128xf32>
      %463 = arith.mulf %456, %462 : vector<8x128xf32>
      %464 = arith.addf %428, %463 : vector<8x128xf32>
      %c0_258 = arith.constant 0 : index
      %c14_259 = arith.constant 14 : index
      %465 = vector.load %arg2[%c0_258, %c14_259] : memref<8x18xf32, #tpu.memory_space<vmem>>, vector<8x1xf32>
      %466 = vector.broadcast %465 : vector<8x1xf32> to vector<8x128xf32>
      %467 = arith.mulf %456, %466 : vector<8x128xf32>
      %468 = arith.addf %450, %467 : vector<8x128xf32>
      %469 = arith.maximumf %451, %456 : vector<8x128xf32>
      %c11_i32_260 = arith.constant 11 : i32
      %470 = arith.addi %arg13, %c11_i32_260 : i32
      %c0_261 = arith.constant 0 : index
      %471 = arith.index_cast %470 : i32 to index
      %c0_262 = arith.constant 0 : index
      %c0_263 = arith.constant 0 : index
      %472 = vector.load %arg1[%c0_261, %471, %c0_262, %c0_263] : memref<1x28x8x130xf32, #tpu.memory_space<vmem>>, vector<1x1x8x128xf32>
      %473 = vector.shape_cast %472 : vector<1x1x8x128xf32> to vector<8x128xf32>
      %c0_264 = arith.constant 0 : index
      %c33 = arith.constant 33 : index
      %474 = vector.load %arg4[%c0_264, %c33] : memref<8x54xf32, #tpu.memory_space<vmem>>, vector<8x1xf32>
      %475 = vector.broadcast %474 : vector<8x1xf32> to vector<8x128xf32>
      %476 = arith.mulf %473, %475 : vector<8x128xf32>
      %477 = arith.addf %442, %476 : vector<8x128xf32>
      %c0_265 = arith.constant 0 : index
      %c24_266 = arith.constant 24 : index
      %478 = vector.load %arg3[%c0_265, %c24_266] : memref<8x36xf32, #tpu.memory_space<vmem>>, vector<8x1xf32>
      %479 = vector.broadcast %478 : vector<8x1xf32> to vector<8x128xf32>
      %480 = arith.mulf %473, %479 : vector<8x128xf32>
      %481 = arith.addf %446, %480 : vector<8x128xf32>
      %c0_267 = arith.constant 0 : index
      %c15_268 = arith.constant 15 : index
      %482 = vector.load %arg2[%c0_267, %c15_268] : memref<8x18xf32, #tpu.memory_space<vmem>>, vector<8x1xf32>
      %483 = vector.broadcast %482 : vector<8x1xf32> to vector<8x128xf32>
      %484 = arith.mulf %473, %483 : vector<8x128xf32>
      %485 = arith.addf %468, %484 : vector<8x128xf32>
      %486 = arith.maximumf %469, %473 : vector<8x128xf32>
      %c0_i32_269 = arith.constant 0 : i32
      %487 = arith.addi %c0_i32_269, %arg13 : i32
      %c11_i32_270 = arith.constant 11 : i32
      %488 = arith.addi %487, %c11_i32_270 : i32
      %489 = arith.index_cast %488 : i32 to index
      %c0_271 = arith.constant 0 : index
      %c0_272 = arith.constant 0 : index
      %490 = vector.load %arg12[%489, %c0_271, %c0_272] : memref<56x8x128xf32, #tpu.memory_space<vmem>>, vector<1x8x128xf32>
      %491 = vector.shape_cast %490 : vector<1x8x128xf32> to vector<8x128xf32>
      %c0_273 = arith.constant 0 : index
      %c34 = arith.constant 34 : index
      %492 = vector.load %arg4[%c0_273, %c34] : memref<8x54xf32, #tpu.memory_space<vmem>>, vector<8x1xf32>
      %493 = vector.broadcast %492 : vector<8x1xf32> to vector<8x128xf32>
      %494 = arith.mulf %491, %493 : vector<8x128xf32>
      %495 = arith.addf %460, %494 : vector<8x128xf32>
      %c0_274 = arith.constant 0 : index
      %c25_275 = arith.constant 25 : index
      %496 = vector.load %arg3[%c0_274, %c25_275] : memref<8x36xf32, #tpu.memory_space<vmem>>, vector<8x1xf32>
      %497 = vector.broadcast %496 : vector<8x1xf32> to vector<8x128xf32>
      %498 = arith.mulf %491, %497 : vector<8x128xf32>
      %499 = arith.addf %464, %498 : vector<8x128xf32>
      %c0_276 = arith.constant 0 : index
      %c16_277 = arith.constant 16 : index
      %500 = vector.load %arg2[%c0_276, %c16_277] : memref<8x18xf32, #tpu.memory_space<vmem>>, vector<8x1xf32>
      %501 = vector.broadcast %500 : vector<8x1xf32> to vector<8x128xf32>
      %502 = arith.mulf %491, %501 : vector<8x128xf32>
      %503 = arith.addf %485, %502 : vector<8x128xf32>
      %504 = arith.maximumf %486, %491 : vector<8x128xf32>
      %c28_i32_278 = arith.constant 28 : i32
      %505 = arith.addi %c28_i32_278, %arg13 : i32
      %c11_i32_279 = arith.constant 11 : i32
      %506 = arith.addi %505, %c11_i32_279 : i32
      %507 = arith.index_cast %506 : i32 to index
      %c0_280 = arith.constant 0 : index
      %c0_281 = arith.constant 0 : index
      %508 = vector.load %arg12[%507, %c0_280, %c0_281] : memref<56x8x128xf32, #tpu.memory_space<vmem>>, vector<1x8x128xf32>
      %509 = vector.shape_cast %508 : vector<1x8x128xf32> to vector<8x128xf32>
      %c0_282 = arith.constant 0 : index
      %c35 = arith.constant 35 : index
      %510 = vector.load %arg4[%c0_282, %c35] : memref<8x54xf32, #tpu.memory_space<vmem>>, vector<8x1xf32>
      %511 = vector.broadcast %510 : vector<8x1xf32> to vector<8x128xf32>
      %512 = arith.mulf %509, %511 : vector<8x128xf32>
      %513 = arith.addf %477, %512 : vector<8x128xf32>
      %c0_283 = arith.constant 0 : index
      %c26_284 = arith.constant 26 : index
      %514 = vector.load %arg3[%c0_283, %c26_284] : memref<8x36xf32, #tpu.memory_space<vmem>>, vector<8x1xf32>
      %515 = vector.broadcast %514 : vector<8x1xf32> to vector<8x128xf32>
      %516 = arith.mulf %509, %515 : vector<8x128xf32>
      %517 = arith.addf %481, %516 : vector<8x128xf32>
      %c0_285 = arith.constant 0 : index
      %c17_286 = arith.constant 17 : index
      %518 = vector.load %arg2[%c0_285, %c17_286] : memref<8x18xf32, #tpu.memory_space<vmem>>, vector<8x1xf32>
      %519 = vector.broadcast %518 : vector<8x1xf32> to vector<8x128xf32>
      %520 = arith.mulf %509, %519 : vector<8x128xf32>
      %521 = arith.addf %503, %520 : vector<8x128xf32>
      %522 = arith.maximumf %504, %509 : vector<8x128xf32>
      %c12_i32 = arith.constant 12 : i32
      %523 = arith.addi %arg13, %c12_i32 : i32
      %c0_287 = arith.constant 0 : index
      %524 = arith.index_cast %523 : i32 to index
      %c0_288 = arith.constant 0 : index
      %c0_289 = arith.constant 0 : index
      %525 = vector.load %arg1[%c0_287, %524, %c0_288, %c0_289] : memref<1x28x8x130xf32, #tpu.memory_space<vmem>>, vector<1x1x8x128xf32>
      %526 = vector.shape_cast %525 : vector<1x1x8x128xf32> to vector<8x128xf32>
      %c0_290 = arith.constant 0 : index
      %c36 = arith.constant 36 : index
      %527 = vector.load %arg4[%c0_290, %c36] : memref<8x54xf32, #tpu.memory_space<vmem>>, vector<8x1xf32>
      %528 = vector.broadcast %527 : vector<8x1xf32> to vector<8x128xf32>
      %529 = arith.mulf %526, %528 : vector<8x128xf32>
      %530 = arith.addf %495, %529 : vector<8x128xf32>
      %c0_291 = arith.constant 0 : index
      %c27_292 = arith.constant 27 : index
      %531 = vector.load %arg3[%c0_291, %c27_292] : memref<8x36xf32, #tpu.memory_space<vmem>>, vector<8x1xf32>
      %532 = vector.broadcast %531 : vector<8x1xf32> to vector<8x128xf32>
      %533 = arith.mulf %526, %532 : vector<8x128xf32>
      %534 = arith.addf %499, %533 : vector<8x128xf32>
      %c0_i32_293 = arith.constant 0 : i32
      %535 = arith.addi %c0_i32_293, %arg13 : i32
      %c12_i32_294 = arith.constant 12 : i32
      %536 = arith.addi %535, %c12_i32_294 : i32
      %537 = arith.index_cast %536 : i32 to index
      %c0_295 = arith.constant 0 : index
      %c0_296 = arith.constant 0 : index
      %538 = vector.load %arg12[%537, %c0_295, %c0_296] : memref<56x8x128xf32, #tpu.memory_space<vmem>>, vector<1x8x128xf32>
      %539 = vector.shape_cast %538 : vector<1x8x128xf32> to vector<8x128xf32>
      %c0_297 = arith.constant 0 : index
      %c37 = arith.constant 37 : index
      %540 = vector.load %arg4[%c0_297, %c37] : memref<8x54xf32, #tpu.memory_space<vmem>>, vector<8x1xf32>
      %541 = vector.broadcast %540 : vector<8x1xf32> to vector<8x128xf32>
      %542 = arith.mulf %539, %541 : vector<8x128xf32>
      %543 = arith.addf %513, %542 : vector<8x128xf32>
      %c0_298 = arith.constant 0 : index
      %c28_299 = arith.constant 28 : index
      %544 = vector.load %arg3[%c0_298, %c28_299] : memref<8x36xf32, #tpu.memory_space<vmem>>, vector<8x1xf32>
      %545 = vector.broadcast %544 : vector<8x1xf32> to vector<8x128xf32>
      %546 = arith.mulf %539, %545 : vector<8x128xf32>
      %547 = arith.addf %517, %546 : vector<8x128xf32>
      %c28_i32_300 = arith.constant 28 : i32
      %548 = arith.addi %c28_i32_300, %arg13 : i32
      %c12_i32_301 = arith.constant 12 : i32
      %549 = arith.addi %548, %c12_i32_301 : i32
      %550 = arith.index_cast %549 : i32 to index
      %c0_302 = arith.constant 0 : index
      %c0_303 = arith.constant 0 : index
      %551 = vector.load %arg12[%550, %c0_302, %c0_303] : memref<56x8x128xf32, #tpu.memory_space<vmem>>, vector<1x8x128xf32>
      %552 = vector.shape_cast %551 : vector<1x8x128xf32> to vector<8x128xf32>
      %c0_304 = arith.constant 0 : index
      %c38 = arith.constant 38 : index
      %553 = vector.load %arg4[%c0_304, %c38] : memref<8x54xf32, #tpu.memory_space<vmem>>, vector<8x1xf32>
      %554 = vector.broadcast %553 : vector<8x1xf32> to vector<8x128xf32>
      %555 = arith.mulf %552, %554 : vector<8x128xf32>
      %556 = arith.addf %530, %555 : vector<8x128xf32>
      %c0_305 = arith.constant 0 : index
      %c29_306 = arith.constant 29 : index
      %557 = vector.load %arg3[%c0_305, %c29_306] : memref<8x36xf32, #tpu.memory_space<vmem>>, vector<8x1xf32>
      %558 = vector.broadcast %557 : vector<8x1xf32> to vector<8x128xf32>
      %559 = arith.mulf %552, %558 : vector<8x128xf32>
      %560 = arith.addf %534, %559 : vector<8x128xf32>
      %c13_i32 = arith.constant 13 : i32
      %561 = arith.addi %arg13, %c13_i32 : i32
      %c0_307 = arith.constant 0 : index
      %562 = arith.index_cast %561 : i32 to index
      %c0_308 = arith.constant 0 : index
      %c0_309 = arith.constant 0 : index
      %563 = vector.load %arg1[%c0_307, %562, %c0_308, %c0_309] : memref<1x28x8x130xf32, #tpu.memory_space<vmem>>, vector<1x1x8x128xf32>
      %564 = vector.shape_cast %563 : vector<1x1x8x128xf32> to vector<8x128xf32>
      %c0_310 = arith.constant 0 : index
      %c39 = arith.constant 39 : index
      %565 = vector.load %arg4[%c0_310, %c39] : memref<8x54xf32, #tpu.memory_space<vmem>>, vector<8x1xf32>
      %566 = vector.broadcast %565 : vector<8x1xf32> to vector<8x128xf32>
      %567 = arith.mulf %564, %566 : vector<8x128xf32>
      %568 = arith.addf %543, %567 : vector<8x128xf32>
      %c0_311 = arith.constant 0 : index
      %c30_312 = arith.constant 30 : index
      %569 = vector.load %arg3[%c0_311, %c30_312] : memref<8x36xf32, #tpu.memory_space<vmem>>, vector<8x1xf32>
      %570 = vector.broadcast %569 : vector<8x1xf32> to vector<8x128xf32>
      %571 = arith.mulf %564, %570 : vector<8x128xf32>
      %572 = arith.addf %547, %571 : vector<8x128xf32>
      %c0_i32_313 = arith.constant 0 : i32
      %573 = arith.addi %c0_i32_313, %arg13 : i32
      %c13_i32_314 = arith.constant 13 : i32
      %574 = arith.addi %573, %c13_i32_314 : i32
      %575 = arith.index_cast %574 : i32 to index
      %c0_315 = arith.constant 0 : index
      %c0_316 = arith.constant 0 : index
      %576 = vector.load %arg12[%575, %c0_315, %c0_316] : memref<56x8x128xf32, #tpu.memory_space<vmem>>, vector<1x8x128xf32>
      %577 = vector.shape_cast %576 : vector<1x8x128xf32> to vector<8x128xf32>
      %c0_317 = arith.constant 0 : index
      %c40 = arith.constant 40 : index
      %578 = vector.load %arg4[%c0_317, %c40] : memref<8x54xf32, #tpu.memory_space<vmem>>, vector<8x1xf32>
      %579 = vector.broadcast %578 : vector<8x1xf32> to vector<8x128xf32>
      %580 = arith.mulf %577, %579 : vector<8x128xf32>
      %581 = arith.addf %556, %580 : vector<8x128xf32>
      %c0_318 = arith.constant 0 : index
      %c31_319 = arith.constant 31 : index
      %582 = vector.load %arg3[%c0_318, %c31_319] : memref<8x36xf32, #tpu.memory_space<vmem>>, vector<8x1xf32>
      %583 = vector.broadcast %582 : vector<8x1xf32> to vector<8x128xf32>
      %584 = arith.mulf %577, %583 : vector<8x128xf32>
      %585 = arith.addf %560, %584 : vector<8x128xf32>
      %c28_i32_320 = arith.constant 28 : i32
      %586 = arith.addi %c28_i32_320, %arg13 : i32
      %c13_i32_321 = arith.constant 13 : i32
      %587 = arith.addi %586, %c13_i32_321 : i32
      %588 = arith.index_cast %587 : i32 to index
      %c0_322 = arith.constant 0 : index
      %c0_323 = arith.constant 0 : index
      %589 = vector.load %arg12[%588, %c0_322, %c0_323] : memref<56x8x128xf32, #tpu.memory_space<vmem>>, vector<1x8x128xf32>
      %590 = vector.shape_cast %589 : vector<1x8x128xf32> to vector<8x128xf32>
      %c0_324 = arith.constant 0 : index
      %c41 = arith.constant 41 : index
      %591 = vector.load %arg4[%c0_324, %c41] : memref<8x54xf32, #tpu.memory_space<vmem>>, vector<8x1xf32>
      %592 = vector.broadcast %591 : vector<8x1xf32> to vector<8x128xf32>
      %593 = arith.mulf %590, %592 : vector<8x128xf32>
      %594 = arith.addf %568, %593 : vector<8x128xf32>
      %c0_325 = arith.constant 0 : index
      %c32_326 = arith.constant 32 : index
      %595 = vector.load %arg3[%c0_325, %c32_326] : memref<8x36xf32, #tpu.memory_space<vmem>>, vector<8x1xf32>
      %596 = vector.broadcast %595 : vector<8x1xf32> to vector<8x128xf32>
      %597 = arith.mulf %590, %596 : vector<8x128xf32>
      %598 = arith.addf %572, %597 : vector<8x128xf32>
      %c14_i32 = arith.constant 14 : i32
      %599 = arith.addi %arg13, %c14_i32 : i32
      %c0_327 = arith.constant 0 : index
      %600 = arith.index_cast %599 : i32 to index
      %c0_328 = arith.constant 0 : index
      %c0_329 = arith.constant 0 : index
      %601 = vector.load %arg1[%c0_327, %600, %c0_328, %c0_329] : memref<1x28x8x130xf32, #tpu.memory_space<vmem>>, vector<1x1x8x128xf32>
      %602 = vector.shape_cast %601 : vector<1x1x8x128xf32> to vector<8x128xf32>
      %c0_330 = arith.constant 0 : index
      %c42 = arith.constant 42 : index
      %603 = vector.load %arg4[%c0_330, %c42] : memref<8x54xf32, #tpu.memory_space<vmem>>, vector<8x1xf32>
      %604 = vector.broadcast %603 : vector<8x1xf32> to vector<8x128xf32>
      %605 = arith.mulf %602, %604 : vector<8x128xf32>
      %606 = arith.addf %581, %605 : vector<8x128xf32>
      %c0_331 = arith.constant 0 : index
      %c33_332 = arith.constant 33 : index
      %607 = vector.load %arg3[%c0_331, %c33_332] : memref<8x36xf32, #tpu.memory_space<vmem>>, vector<8x1xf32>
      %608 = vector.broadcast %607 : vector<8x1xf32> to vector<8x128xf32>
      %609 = arith.mulf %602, %608 : vector<8x128xf32>
      %610 = arith.addf %585, %609 : vector<8x128xf32>
      %c0_i32_333 = arith.constant 0 : i32
      %611 = arith.addi %c0_i32_333, %arg13 : i32
      %c14_i32_334 = arith.constant 14 : i32
      %612 = arith.addi %611, %c14_i32_334 : i32
      %613 = arith.index_cast %612 : i32 to index
      %c0_335 = arith.constant 0 : index
      %c0_336 = arith.constant 0 : index
      %614 = vector.load %arg12[%613, %c0_335, %c0_336] : memref<56x8x128xf32, #tpu.memory_space<vmem>>, vector<1x8x128xf32>
      %615 = vector.shape_cast %614 : vector<1x8x128xf32> to vector<8x128xf32>
      %c0_337 = arith.constant 0 : index
      %c43 = arith.constant 43 : index
      %616 = vector.load %arg4[%c0_337, %c43] : memref<8x54xf32, #tpu.memory_space<vmem>>, vector<8x1xf32>
      %617 = vector.broadcast %616 : vector<8x1xf32> to vector<8x128xf32>
      %618 = arith.mulf %615, %617 : vector<8x128xf32>
      %619 = arith.addf %594, %618 : vector<8x128xf32>
      %c0_338 = arith.constant 0 : index
      %c34_339 = arith.constant 34 : index
      %620 = vector.load %arg3[%c0_338, %c34_339] : memref<8x36xf32, #tpu.memory_space<vmem>>, vector<8x1xf32>
      %621 = vector.broadcast %620 : vector<8x1xf32> to vector<8x128xf32>
      %622 = arith.mulf %615, %621 : vector<8x128xf32>
      %623 = arith.addf %598, %622 : vector<8x128xf32>
      %c28_i32_340 = arith.constant 28 : i32
      %624 = arith.addi %c28_i32_340, %arg13 : i32
      %c14_i32_341 = arith.constant 14 : i32
      %625 = arith.addi %624, %c14_i32_341 : i32
      %626 = arith.index_cast %625 : i32 to index
      %c0_342 = arith.constant 0 : index
      %c0_343 = arith.constant 0 : index
      %627 = vector.load %arg12[%626, %c0_342, %c0_343] : memref<56x8x128xf32, #tpu.memory_space<vmem>>, vector<1x8x128xf32>
      %628 = vector.shape_cast %627 : vector<1x8x128xf32> to vector<8x128xf32>
      %c0_344 = arith.constant 0 : index
      %c44 = arith.constant 44 : index
      %629 = vector.load %arg4[%c0_344, %c44] : memref<8x54xf32, #tpu.memory_space<vmem>>, vector<8x1xf32>
      %630 = vector.broadcast %629 : vector<8x1xf32> to vector<8x128xf32>
      %631 = arith.mulf %628, %630 : vector<8x128xf32>
      %632 = arith.addf %606, %631 : vector<8x128xf32>
      %c0_345 = arith.constant 0 : index
      %c35_346 = arith.constant 35 : index
      %633 = vector.load %arg3[%c0_345, %c35_346] : memref<8x36xf32, #tpu.memory_space<vmem>>, vector<8x1xf32>
      %634 = vector.broadcast %633 : vector<8x1xf32> to vector<8x128xf32>
      %635 = arith.mulf %628, %634 : vector<8x128xf32>
      %636 = arith.addf %610, %635 : vector<8x128xf32>
      %c15_i32 = arith.constant 15 : i32
      %637 = arith.addi %arg13, %c15_i32 : i32
      %c0_347 = arith.constant 0 : index
      %638 = arith.index_cast %637 : i32 to index
      %c0_348 = arith.constant 0 : index
      %c0_349 = arith.constant 0 : index
      %639 = vector.load %arg1[%c0_347, %638, %c0_348, %c0_349] : memref<1x28x8x130xf32, #tpu.memory_space<vmem>>, vector<1x1x8x128xf32>
      %640 = vector.shape_cast %639 : vector<1x1x8x128xf32> to vector<8x128xf32>
      %c0_350 = arith.constant 0 : index
      %c45 = arith.constant 45 : index
      %641 = vector.load %arg4[%c0_350, %c45] : memref<8x54xf32, #tpu.memory_space<vmem>>, vector<8x1xf32>
      %642 = vector.broadcast %641 : vector<8x1xf32> to vector<8x128xf32>
      %643 = arith.mulf %640, %642 : vector<8x128xf32>
      %644 = arith.addf %619, %643 : vector<8x128xf32>
      %c0_i32_351 = arith.constant 0 : i32
      %645 = arith.addi %c0_i32_351, %arg13 : i32
      %c15_i32_352 = arith.constant 15 : i32
      %646 = arith.addi %645, %c15_i32_352 : i32
      %647 = arith.index_cast %646 : i32 to index
      %c0_353 = arith.constant 0 : index
      %c0_354 = arith.constant 0 : index
      %648 = vector.load %arg12[%647, %c0_353, %c0_354] : memref<56x8x128xf32, #tpu.memory_space<vmem>>, vector<1x8x128xf32>
      %649 = vector.shape_cast %648 : vector<1x8x128xf32> to vector<8x128xf32>
      %c0_355 = arith.constant 0 : index
      %c46 = arith.constant 46 : index
      %650 = vector.load %arg4[%c0_355, %c46] : memref<8x54xf32, #tpu.memory_space<vmem>>, vector<8x1xf32>
      %651 = vector.broadcast %650 : vector<8x1xf32> to vector<8x128xf32>
      %652 = arith.mulf %649, %651 : vector<8x128xf32>
      %653 = arith.addf %632, %652 : vector<8x128xf32>
      %c28_i32_356 = arith.constant 28 : i32
      %654 = arith.addi %c28_i32_356, %arg13 : i32
      %c15_i32_357 = arith.constant 15 : i32
      %655 = arith.addi %654, %c15_i32_357 : i32
      %656 = arith.index_cast %655 : i32 to index
      %c0_358 = arith.constant 0 : index
      %c0_359 = arith.constant 0 : index
      %657 = vector.load %arg12[%656, %c0_358, %c0_359] : memref<56x8x128xf32, #tpu.memory_space<vmem>>, vector<1x8x128xf32>
      %658 = vector.shape_cast %657 : vector<1x8x128xf32> to vector<8x128xf32>
      %c0_360 = arith.constant 0 : index
      %c47 = arith.constant 47 : index
      %659 = vector.load %arg4[%c0_360, %c47] : memref<8x54xf32, #tpu.memory_space<vmem>>, vector<8x1xf32>
      %660 = vector.broadcast %659 : vector<8x1xf32> to vector<8x128xf32>
      %661 = arith.mulf %658, %660 : vector<8x128xf32>
      %662 = arith.addf %644, %661 : vector<8x128xf32>
      %c16_i32 = arith.constant 16 : i32
      %663 = arith.addi %arg13, %c16_i32 : i32
      %c0_361 = arith.constant 0 : index
      %664 = arith.index_cast %663 : i32 to index
      %c0_362 = arith.constant 0 : index
      %c0_363 = arith.constant 0 : index
      %665 = vector.load %arg1[%c0_361, %664, %c0_362, %c0_363] : memref<1x28x8x130xf32, #tpu.memory_space<vmem>>, vector<1x1x8x128xf32>
      %666 = vector.shape_cast %665 : vector<1x1x8x128xf32> to vector<8x128xf32>
      %c0_364 = arith.constant 0 : index
      %c48 = arith.constant 48 : index
      %667 = vector.load %arg4[%c0_364, %c48] : memref<8x54xf32, #tpu.memory_space<vmem>>, vector<8x1xf32>
      %668 = vector.broadcast %667 : vector<8x1xf32> to vector<8x128xf32>
      %669 = arith.mulf %666, %668 : vector<8x128xf32>
      %670 = arith.addf %653, %669 : vector<8x128xf32>
      %c0_i32_365 = arith.constant 0 : i32
      %671 = arith.addi %c0_i32_365, %arg13 : i32
      %c16_i32_366 = arith.constant 16 : i32
      %672 = arith.addi %671, %c16_i32_366 : i32
      %673 = arith.index_cast %672 : i32 to index
      %c0_367 = arith.constant 0 : index
      %c0_368 = arith.constant 0 : index
      %674 = vector.load %arg12[%673, %c0_367, %c0_368] : memref<56x8x128xf32, #tpu.memory_space<vmem>>, vector<1x8x128xf32>
      %675 = vector.shape_cast %674 : vector<1x8x128xf32> to vector<8x128xf32>
      %c0_369 = arith.constant 0 : index
      %c49 = arith.constant 49 : index
      %676 = vector.load %arg4[%c0_369, %c49] : memref<8x54xf32, #tpu.memory_space<vmem>>, vector<8x1xf32>
      %677 = vector.broadcast %676 : vector<8x1xf32> to vector<8x128xf32>
      %678 = arith.mulf %675, %677 : vector<8x128xf32>
      %679 = arith.addf %662, %678 : vector<8x128xf32>
      %c28_i32_370 = arith.constant 28 : i32
      %680 = arith.addi %c28_i32_370, %arg13 : i32
      %c16_i32_371 = arith.constant 16 : i32
      %681 = arith.addi %680, %c16_i32_371 : i32
      %682 = arith.index_cast %681 : i32 to index
      %c0_372 = arith.constant 0 : index
      %c0_373 = arith.constant 0 : index
      %683 = vector.load %arg12[%682, %c0_372, %c0_373] : memref<56x8x128xf32, #tpu.memory_space<vmem>>, vector<1x8x128xf32>
      %684 = vector.shape_cast %683 : vector<1x8x128xf32> to vector<8x128xf32>
      %c0_374 = arith.constant 0 : index
      %c50 = arith.constant 50 : index
      %685 = vector.load %arg4[%c0_374, %c50] : memref<8x54xf32, #tpu.memory_space<vmem>>, vector<8x1xf32>
      %686 = vector.broadcast %685 : vector<8x1xf32> to vector<8x128xf32>
      %687 = arith.mulf %684, %686 : vector<8x128xf32>
      %688 = arith.addf %670, %687 : vector<8x128xf32>
      %c17_i32 = arith.constant 17 : i32
      %689 = arith.addi %arg13, %c17_i32 : i32
      %c0_375 = arith.constant 0 : index
      %690 = arith.index_cast %689 : i32 to index
      %c0_376 = arith.constant 0 : index
      %c0_377 = arith.constant 0 : index
      %691 = vector.load %arg1[%c0_375, %690, %c0_376, %c0_377] : memref<1x28x8x130xf32, #tpu.memory_space<vmem>>, vector<1x1x8x128xf32>
      %692 = vector.shape_cast %691 : vector<1x1x8x128xf32> to vector<8x128xf32>
      %c0_378 = arith.constant 0 : index
      %c51 = arith.constant 51 : index
      %693 = vector.load %arg4[%c0_378, %c51] : memref<8x54xf32, #tpu.memory_space<vmem>>, vector<8x1xf32>
      %694 = vector.broadcast %693 : vector<8x1xf32> to vector<8x128xf32>
      %695 = arith.mulf %692, %694 : vector<8x128xf32>
      %696 = arith.addf %679, %695 : vector<8x128xf32>
      %c0_i32_379 = arith.constant 0 : i32
      %697 = arith.addi %c0_i32_379, %arg13 : i32
      %c17_i32_380 = arith.constant 17 : i32
      %698 = arith.addi %697, %c17_i32_380 : i32
      %699 = arith.index_cast %698 : i32 to index
      %c0_381 = arith.constant 0 : index
      %c0_382 = arith.constant 0 : index
      %700 = vector.load %arg12[%699, %c0_381, %c0_382] : memref<56x8x128xf32, #tpu.memory_space<vmem>>, vector<1x8x128xf32>
      %701 = vector.shape_cast %700 : vector<1x8x128xf32> to vector<8x128xf32>
      %c0_383 = arith.constant 0 : index
      %c52 = arith.constant 52 : index
      %702 = vector.load %arg4[%c0_383, %c52] : memref<8x54xf32, #tpu.memory_space<vmem>>, vector<8x1xf32>
      %703 = vector.broadcast %702 : vector<8x1xf32> to vector<8x128xf32>
      %704 = arith.mulf %701, %703 : vector<8x128xf32>
      %705 = arith.addf %688, %704 : vector<8x128xf32>
      %c28_i32_384 = arith.constant 28 : i32
      %706 = arith.addi %c28_i32_384, %arg13 : i32
      %c17_i32_385 = arith.constant 17 : i32
      %707 = arith.addi %706, %c17_i32_385 : i32
      %708 = arith.index_cast %707 : i32 to index
      %c0_386 = arith.constant 0 : index
      %c0_387 = arith.constant 0 : index
      %709 = vector.load %arg12[%708, %c0_386, %c0_387] : memref<56x8x128xf32, #tpu.memory_space<vmem>>, vector<1x8x128xf32>
      %710 = vector.shape_cast %709 : vector<1x8x128xf32> to vector<8x128xf32>
      %c0_388 = arith.constant 0 : index
      %c53 = arith.constant 53 : index
      %711 = vector.load %arg4[%c0_388, %c53] : memref<8x54xf32, #tpu.memory_space<vmem>>, vector<8x1xf32>
      %712 = vector.broadcast %711 : vector<8x1xf32> to vector<8x128xf32>
      %713 = arith.mulf %710, %712 : vector<8x128xf32>
      %714 = arith.addf %696, %713 : vector<8x128xf32>
      %715 = vector.broadcast %9 : vector<8x1xf32> to vector<8x128xf32>
      %716 = arith.addf %521, %715 : vector<8x128xf32>
      %cst_389 = arith.constant 0.000000e+00 : f32
      %717 = vector.broadcast %cst_389 : f32 to vector<8x128xf32>
      %718 = arith.maximumf %716, %717 : vector<8x128xf32>
      %719 = arith.addf %636, %623 : vector<8x128xf32>
      %720 = vector.broadcast %10 : vector<8x1xf32> to vector<8x128xf32>
      %721 = arith.addf %719, %720 : vector<8x128xf32>
      %cst_390 = arith.constant 0.000000e+00 : f32
      %722 = vector.broadcast %cst_390 : f32 to vector<8x128xf32>
      %723 = arith.maximumf %721, %722 : vector<8x128xf32>
      %724 = arith.addf %705, %714 : vector<8x128xf32>
      %725 = vector.broadcast %11 : vector<8x1xf32> to vector<8x128xf32>
      %726 = arith.addf %724, %725 : vector<8x128xf32>
      %cst_391 = arith.constant 0.000000e+00 : f32
      %727 = vector.broadcast %cst_391 : f32 to vector<8x128xf32>
      %728 = arith.maximumf %726, %727 : vector<8x128xf32>
      %729 = tpu.concatenate %718, %723, %728, %522 in 0 : vector<8x128xf32>, vector<8x128xf32>, vector<8x128xf32>, vector<8x128xf32> -> vector<32x128xf32>
      %cst_392 = arith.constant dense<0.000000e+00> : vector<8x128xf32>
      %730 = tpu.matmul %6, %729, %cst_392 {dimension_numbers = #tpu.dot_dimension_numbers<[1], [0], [0], [1], [0, 0, 1, 1], [], []>} : vector<8x32xf32>, vector<32x128xf32>, vector<8x128xf32> -> vector<8x128xf32>
      %731 = vector.broadcast %7 : vector<8x1xf32> to vector<8x128xf32>
      %732 = arith.addf %730, %731 : vector<8x128xf32>
      %cst_393 = arith.constant 0.000000e+00 : f32
      %733 = vector.broadcast %cst_393 : f32 to vector<8x128xf32>
      %734 = arith.maximumf %732, %733 : vector<8x128xf32>
      %735 = vector.broadcast %8 : vector<8x1xf32> to vector<8x128xf32>
      %736 = arith.mulf %735, %734 : vector<8x128xf32>
      %cst_394 = arith.constant 1.000000e+00 : f32
      %737 = vector.broadcast %cst_394 : f32 to vector<8x1xf32>
      %738 = arith.subf %737, %8 : vector<8x1xf32>
      %739 = vector.broadcast %738 : vector<8x1xf32> to vector<8x128xf32>
      %740 = arith.mulf %739, %732 : vector<8x128xf32>
      %741 = arith.addf %736, %740 : vector<8x128xf32>
      %c0_395 = arith.constant 0 : index
      %742 = arith.index_cast %arg13 : i32 to index
      %c0_396 = arith.constant 0 : index
      %c0_397 = arith.constant 0 : index
      %743 = vector.load %arg11[%c0_395, %742, %c0_396, %c0_397] : memref<1x11x8x128xf32, #tpu.memory_space<vmem>>, vector<1x1x8x128xf32>
      %744 = vector.shape_cast %743 : vector<1x1x8x128xf32> to vector<8x128xf32>
      %745 = vector.shape_cast %741 : vector<8x128xf32> to vector<1x1x8x128xf32>
      tpu.vector_store %arg11[%c0_395, %742, %c0_396, %c0_397], %745 {strides = array<i32>} : memref<1x11x8x128xf32, #tpu.memory_space<vmem>>, vector<1x1x8x128xf32>,
    }
    %c11_i32_22 = arith.constant 11 : i32
    return
  }
  func.func @transform_0(%arg0: i32) -> (i32, i32, i32, i32) {
    %c0_i32 = arith.constant 0 : i32
    %c0_i32_0 = arith.constant 0 : i32
    %c0_i32_1 = arith.constant 0 : i32
    %c0_i32_2 = arith.constant 0 : i32
    return %arg0, %c0_i32, %c0_i32_0, %c0_i32_1 : i32, i32, i32, i32
  }
  func.func @transform_1(%arg0: i32) -> (i32, i32) {
    %c0_i32 = arith.constant 0 : i32
    %c0_i32_0 = arith.constant 0 : i32
    %c0_i32_1 = arith.constant 0 : i32
    return %c0_i32, %c0_i32_0 : i32, i32
  }
  func.func @transform_2(%arg0: i32) -> (i32, i32) {
    %c0_i32 = arith.constant 0 : i32
    %c0_i32_0 = arith.constant 0 : i32
    %c0_i32_1 = arith.constant 0 : i32
    return %c0_i32, %c0_i32_0 : i32, i32
  }
  func.func @transform_3(%arg0: i32) -> (i32, i32) {
    %c0_i32 = arith.constant 0 : i32
    %c0_i32_0 = arith.constant 0 : i32
    %c0_i32_1 = arith.constant 0 : i32
    return %c0_i32, %c0_i32_0 : i32, i32
  }
  func.func @transform_4(%arg0: i32) -> (i32, i32) {
    %c0_i32 = arith.constant 0 : i32
    %c0_i32_0 = arith.constant 0 : i32
    %c0_i32_1 = arith.constant 0 : i32
    return %c0_i32, %c0_i32_0 : i32, i32
  }
  func.func @transform_5(%arg0: i32) -> (i32, i32) {
    %c0_i32 = arith.constant 0 : i32
    %c0_i32_0 = arith.constant 0 : i32
    %c0_i32_1 = arith.constant 0 : i32
    return %c0_i32, %c0_i32_0 : i32, i32
  }
  func.func @transform_6(%arg0: i32) -> (i32, i32) {
    %c0_i32 = arith.constant 0 : i32
    %c0_i32_0 = arith.constant 0 : i32
    %c0_i32_1 = arith.constant 0 : i32
    return %c0_i32, %c0_i32_0 : i32, i32
  }
  func.func @transform_7(%arg0: i32) -> (i32, i32) {
    %c0_i32 = arith.constant 0 : i32
    %c0_i32_0 = arith.constant 0 : i32
    %c0_i32_1 = arith.constant 0 : i32
    return %c0_i32, %c0_i32_0 : i32, i32
  }
  func.func @transform_8(%arg0: i32) -> (i32, i32) {
    %c0_i32 = arith.constant 0 : i32
    %c0_i32_0 = arith.constant 0 : i32
    %c0_i32_1 = arith.constant 0 : i32
    return %c0_i32, %c0_i32_0 : i32, i32
  }
  func.func @transform_9(%arg0: i32) -> (i32, i32) {
    %c0_i32 = arith.constant 0 : i32
    %c0_i32_0 = arith.constant 0 : i32
    %c0_i32_1 = arith.constant 0 : i32
    return %c0_i32, %c0_i32_0 : i32, i32
  }
  func.func @transform_10(%arg0: i32) -> (i32, i32, i32, i32) {
    %c0_i32 = arith.constant 0 : i32
    %c0_i32_0 = arith.constant 0 : i32
    %c0_i32_1 = arith.constant 0 : i32
    %c0_i32_2 = arith.constant 0 : i32
    return %arg0, %c0_i32, %c0_i32_0, %c0_i32_1 : i32, i32, i32, i32
  }
}

</mosaic_0001>

<llo_original>
// kernel: tpu_custom_call.1
$region0: #{tpu_custom_call.1}
  #allocation0 [shape = 'u32[]', space=smem, size = 0x4, offset = 0x4, fixed_abs, tag = 'smem constant byte address 0x4 - core index']
  #allocation1 [shape = 'u32[72,128]{1,0:T(1,128)}', space=vmem, size = 0x9000, scoped, tag = 'internal scratch']
  #allocation2 [shape = 'f32[56,8,128]{2,1,0:T(8,128)}', space=vmem, size = 0x38000, scoped, tag = 'scratch operand']
  %s0 = inlined_call_operand.hbm [shape: f32[1,28,8,130], index: 0, kind: input, shape index: {}]
  %s1 = inlined_call_operand.vmem [shape: f32[8,18], index: 1, kind: input, shape index: {}]
  %s2 = inlined_call_operand.vmem [shape: f32[8,36], index: 2, kind: input, shape index: {}]
  %s3 = inlined_call_operand.vmem [shape: f32[8,54], index: 3, kind: input, shape index: {}]
  %s4 = inlined_call_operand.vmem [shape: f32[8,1], index: 4, kind: input, shape index: {}]
  %s5 = inlined_call_operand.vmem [shape: f32[8,1], index: 5, kind: input, shape index: {}]
  %s6 = inlined_call_operand.vmem [shape: f32[8,1], index: 6, kind: input, shape index: {}]
  %s7 = inlined_call_operand.vmem [shape: f32[8,32], index: 7, kind: input, shape index: {}]
  %s8 = inlined_call_operand.vmem [shape: f32[8,1], index: 8, kind: input, shape index: {}]
  %s9 = inlined_call_operand.vmem [shape: f32[8,1], index: 9, kind: input, shape index: {}]
  %s10 = inlined_call_operand.hbm [shape: f32[1,11,8,128], index: 10, kind: output, shape index: {}]
  %s11 = sld [smem:[#allocation0]]
  $region61: #{tpu_custom_call.1} parent=0
    _
  %s13 = ssub.s32 1, %s11
  %s14 = scalar_select 0, %s13, %s11
  $region1: #{tpu_custom_call.1} parent=0
    #allocation3 [shape = 'u8[229376]{0}', space=vmem, size = 0x38000, scoped, tag = 'input window, operand 0, single buffered']
    #allocation4 [shape = 's32[1]{0}', space=sflag, size = 0x4, scoped, tag = 'scoped memory for tpu_custom_call.1']
    #allocation5 [shape = 's32[1]{0}', space=sflag, size = 0x4, scoped, tag = 'scoped memory for tpu_custom_call.1']
    #allocation6 [shape = 'u8[45056]{0}', space=vmem, size = 0xb000, scoped, tag = 'output window, operand 0, single buffered']
    %15 = vsyncpa [#allocation4], 0
    %16 = vsyncpa [#allocation5], 0
    // Predicated region
    $region2: #{tpu_custom_call.1} parent=1 // pred_check
      _
    $region3: #{tpu_custom_call.1} parent=1 // pred_check_branch
      %18 = sbr.rel (0) target = $region5
    $region4: #{tpu_custom_call.1} parent=1 // pred_region
      %20 = vsyncadd [#allocation4], 0
      %s21 = sshll.u32 %s0, 4
      %s22 = int_to_ptr.hbm [resolvable:$true] %s21
      %s23 = sshll.u32 [#allocation3], 4
      %s24 = int_to_ptr.vmem [resolvable:$true] %s23
      %29 = dma.hbm_to_vmem [thread:$0]  %s22, 7168, %s24, [#allocation4], 256, 256, 16
    $region5: #{tpu_custom_call.1} parent=1 // pred_fallthru
      _
    // Predicated region
    $region6: #{tpu_custom_call.1} parent=1 // pred_check
      _
    $region7: #{tpu_custom_call.1} parent=1 // pred_check_branch
      %31 = sbr.rel (0) target = $region9
    $region8: #{tpu_custom_call.1} parent=1 // pred_region
      _
    $region9: #{tpu_custom_call.1} parent=1 // pred_fallthru
      _
    // Predicated region
    $region10: #{tpu_custom_call.1} parent=1 // pred_check
      _
    $region11: #{tpu_custom_call.1} parent=1 // pred_check_branch
      %33 = sbr.rel (0) target = $region13
    $region12: #{tpu_custom_call.1} parent=1 // pred_region
      _
    $region13: #{tpu_custom_call.1} parent=1 // pred_fallthru
      _
    // Predicated region
    $region14: #{tpu_custom_call.1} parent=1 // pred_check
      _
    $region15: #{tpu_custom_call.1} parent=1 // pred_check_branch
      %35 = sbr.rel (0) target = $region17
    $region16: #{tpu_custom_call.1} parent=1 // pred_region
      _
    $region17: #{tpu_custom_call.1} parent=1 // pred_fallthru
      _
    // Predicated region
    $region18: #{tpu_custom_call.1} parent=1 // pred_check
      _
    $region19: #{tpu_custom_call.1} parent=1 // pred_check_branch
      %37 = sbr.rel (0) target = $region21
    $region20: #{tpu_custom_call.1} parent=1 // pred_region
      _
    $region21: #{tpu_custom_call.1} parent=1 // pred_fallthru
      _
    // Predicated region
    $region22: #{tpu_custom_call.1} parent=1 // pred_check
      _
    $region23: #{tpu_custom_call.1} parent=1 // pred_check_branch
      %39 = sbr.rel (0) target = $region25
    $region24: #{tpu_custom_call.1} parent=1 // pred_region
      _
    $region25: #{tpu_custom_call.1} parent=1 // pred_fallthru
      _
    // Predicated region
    $region26: #{tpu_custom_call.1} parent=1 // pred_check
      _
    $region27: #{tpu_custom_call.1} parent=1 // pred_check_branch
      %41 = sbr.rel (0) target = $region29
    $region28: #{tpu_custom_call.1} parent=1 // pred_region
      _
    $region29: #{tpu_custom_call.1} parent=1 // pred_fallthru
      _
    // Predicated region
    $region30: #{tpu_custom_call.1} parent=1 // pred_check
      _
    $region31: #{tpu_custom_call.1} parent=1 // pred_check_branch
      %43 = sbr.rel (0) target = $region33
    $region32: #{tpu_custom_call.1} parent=1 // pred_region
      _
    $region33: #{tpu_custom_call.1} parent=1 // pred_fallthru
      _
    // Predicated region
    $region34: #{tpu_custom_call.1} parent=1 // pred_check
      _
    $region35: #{tpu_custom_call.1} parent=1 // pred_check_branch
      %45 = sbr.rel (0) target = $region37
    $region36: #{tpu_custom_call.1} parent=1 // pred_region
      _
    $region37: #{tpu_custom_call.1} parent=1 // pred_fallthru
      _
    // Predicated region
    $region38: #{tpu_custom_call.1} parent=1 // pred_check
      _
    $region39: #{tpu_custom_call.1} parent=1 // pred_check_branch
      %47 = sbr.rel (0) target = $region41
    $region40: #{tpu_custom_call.1} parent=1 // pred_region
      _
    $region41: #{tpu_custom_call.1} parent=1 // pred_fallthru
      _
    // Predicated region
    $region42: #{tpu_custom_call.1} parent=1 // pred_check
      _
    $region43: #{tpu_custom_call.1} parent=1 // pred_check_branch
      %49 = sbr.rel (0) target = $region45
    $region44: #{tpu_custom_call.1} parent=1 // pred_region
      %51 = dma.done [#allocation4], 7168
    $region45: #{tpu_custom_call.1} parent=1 // pred_fallthru
      _
    %v52 = vld [vmem:[#allocation3] sm:$0xff]
    %v53 = vld [vmem:[#allocation3 + $0x8] sm:$0xff]
    %v54 = vld [vmem:[#allocation3 + $0x10] sm:$0xff]
    %v55 = vld [vmem:[#allocation3 + $0x18] sm:$0xff]
    %v56 = vld [vmem:[#allocation3 + $0x20] sm:$0xff]
    %v57 = vld [vmem:[#allocation3 + $0x28] sm:$0xff]
    %v58 = vld [vmem:[#allocation3 + $0x30] sm:$0xff]
    %v59 = vld [vmem:[#allocation3 + $0x38] sm:$0xff]
    %v60 = vld [vmem:[#allocation3 + $0x40] sm:$0xff]
    %v61 = vld [vmem:[#allocation3 + $0x48] sm:$0xff]
    %v62 = vld [vmem:[#allocation3 + $0x50] sm:$0xff]
    %v63 = vld [vmem:[#allocation3 + $0x58] sm:$0xff]
    %v64 = vld [vmem:[#allocation3 + $0x60] sm:$0xff]
    %v65 = vld [vmem:[#allocation3 + $0x68] sm:$0xff]
    %v66 = vld [vmem:[#allocation3 + $0x70] sm:$0xff]
    %v67 = vld [vmem:[#allocation3 + $0x78] sm:$0xff]
    %v68 = vld [vmem:[#allocation3 + $0x80] sm:$0xff]
    %v69 = vld [vmem:[#allocation3 + $0x88] sm:$0xff]
    %v70 = vld [vmem:[#allocation3 + $0x90] sm:$0xff]
    %v71 = vld [vmem:[#allocation3 + $0x98] sm:$0xff]
    %v72 = vld [vmem:[#allocation3 + $0xa0] sm:$0xff]
    %v73 = vld [vmem:[#allocation3 + $0xa8] sm:$0xff]
    %v74 = vld [vmem:[#allocation3 + $0xb0] sm:$0xff]
    %v75 = vld [vmem:[#allocation3 + $0xb8] sm:$0xff]
    %v76 = vld [vmem:[#allocation3 + $0xc0] sm:$0xff]
    %v77 = vld [vmem:[#allocation3 + $0xc8] sm:$0xff]
    %v78 = vld [vmem:[#allocation3 + $0xd0] sm:$0xff]
    %v79 = vld [vmem:[#allocation3 + $0xd8] sm:$0xff]
    %v80 = vld [vmem:[#allocation3 + $0xe0] sm:$0xff]
    %v81 = vld [vmem:[#allocation3 + $0xe8] sm:$0xff]
    %v82 = vld [vmem:[#allocation3 + $0xf0] sm:$0xff]
    %v83 = vld [vmem:[#allocation3 + $0xf8] sm:$0xff]
    %v84 = vld [vmem:[#allocation3 + $0x100] sm:$0xff]
    %v85 = vld [vmem:[#allocation3 + $0x108] sm:$0xff]
    %v86 = vld [vmem:[#allocation3 + $0x110] sm:$0xff]
    %v87 = vld [vmem:[#allocation3 + $0x118] sm:$0xff]
    %v88 = vld [vmem:[#allocation3 + $0x120] sm:$0xff]
    %v89 = vld [vmem:[#allocation3 + $0x128] sm:$0xff]
    %v90 = vld [vmem:[#allocation3 + $0x130] sm:$0xff]
    %v91 = vld [vmem:[#allocation3 + $0x138] sm:$0xff]
    %v92 = vld [vmem:[#allocation3 + $0x140] sm:$0xff]
    %v93 = vld [vmem:[#allocation3 + $0x148] sm:$0xff]
    %v94 = vld [vmem:[#allocation3 + $0x150] sm:$0xff]
    %v95 = vld [vmem:[#allocation3 + $0x158] sm:$0xff]
    %v96 = vld [vmem:[#allocation3 + $0x160] sm:$0xff]
    %v97 = vld [vmem:[#allocation3 + $0x168] sm:$0xff]
    %v98 = vld [vmem:[#allocation3 + $0x170] sm:$0xff]
    %v99 = vld [vmem:[#allocation3 + $0x178] sm:$0xff]
    %v100 = vld [vmem:[#allocation3 + $0x180] sm:$0xff]
    %v101 = vld [vmem:[#allocation3 + $0x188] sm:$0xff]
    %v102 = vld [vmem:[#allocation3 + $0x190] sm:$0xff]
    %v103 = vld [vmem:[#allocation3 + $0x198] sm:$0xff]
    %v104 = vld [vmem:[#allocation3 + $0x1a0] sm:$0xff]
    %v105 = vld [vmem:[#allocation3 + $0x1a8] sm:$0xff]
    %v106 = vld [vmem:[#allocation3 + $0x1b0] sm:$0xff]
    %v107 = vld [vmem:[#allocation3 + $0x1b8] sm:$0xff]
    %164 = vrot.lane.b32.xlu0 %v52, 127
    %v165 = vpop.permute.xlu0 %164
    %166 = vrot.lane.b32.xlu0 %v53, 127
    %v167 = vpop.permute.xlu0 %166
    %168 = vrot.lane.b32.xlu0 %v54, 127
    %v169 = vpop.permute.xlu0 %168
    %170 = vrot.lane.b32.xlu0 %v55, 127
    %v171 = vpop.permute.xlu0 %170
    %172 = vrot.lane.b32.xlu0 %v56, 127
    %v173 = vpop.permute.xlu0 %172
    %174 = vrot.lane.b32.xlu0 %v57, 127
    %v175 = vpop.permute.xlu0 %174
    %176 = vrot.lane.b32.xlu0 %v58, 127
    %v177 = vpop.permute.xlu0 %176
    %178 = vrot.lane.b32.xlu0 %v59, 127
    %v179 = vpop.permute.xlu0 %178
    %180 = vrot.lane.b32.xlu0 %v60, 127
    %v181 = vpop.permute.xlu0 %180
    %182 = vrot.lane.b32.xlu0 %v61, 127
    %v183 = vpop.permute.xlu0 %182
    %184 = vrot.lane.b32.xlu0 %v62, 127
    %v185 = vpop.permute.xlu0 %184
    %186 = vrot.lane.b32.xlu0 %v63, 127
    %v187 = vpop.permute.xlu0 %186
    %188 = vrot.lane.b32.xlu0 %v64, 127
    %v189 = vpop.permute.xlu0 %188
    %190 = vrot.lane.b32.xlu0 %v65, 127
    %v191 = vpop.permute.xlu0 %190
    %192 = vrot.lane.b32.xlu0 %v66, 127
    %v193 = vpop.permute.xlu0 %192
    %194 = vrot.lane.b32.xlu0 %v67, 127
    %v195 = vpop.permute.xlu0 %194
    %196 = vrot.lane.b32.xlu0 %v68, 127
    %v197 = vpop.permute.xlu0 %196
    %198 = vrot.lane.b32.xlu0 %v69, 127
    %v199 = vpop.permute.xlu0 %198
    %200 = vrot.lane.b32.xlu0 %v70, 127
    %v201 = vpop.permute.xlu0 %200
    %202 = vrot.lane.b32.xlu0 %v71, 127
    %v203 = vpop.permute.xlu0 %202
    %204 = vrot.lane.b32.xlu0 %v72, 127
    %v205 = vpop.permute.xlu0 %204
    %206 = vrot.lane.b32.xlu0 %v73, 127
    %v207 = vpop.permute.xlu0 %206
    %208 = vrot.lane.b32.xlu0 %v74, 127
    %v209 = vpop.permute.xlu0 %208
    %210 = vrot.lane.b32.xlu0 %v75, 127
    %v211 = vpop.permute.xlu0 %210
    %212 = vrot.lane.b32.xlu0 %v76, 127
    %v213 = vpop.permute.xlu0 %212
    %214 = vrot.lane.b32.xlu0 %v77, 127
    %v215 = vpop.permute.xlu0 %214
    %216 = vrot.lane.b32.xlu0 %v78, 127
    %v217 = vpop.permute.xlu0 %216
    %218 = vrot.lane.b32.xlu0 %v79, 127
    %v219 = vpop.permute.xlu0 %218
    %220 = vrot.lane.b32.xlu0 %v80, 127
    %v221 = vpop.permute.xlu0 %220
    %222 = vrot.lane.b32.xlu0 %v81, 127
    %v223 = vpop.permute.xlu0 %222
    %224 = vrot.lane.b32.xlu0 %v82, 127
    %v225 = vpop.permute.xlu0 %224
    %226 = vrot.lane.b32.xlu0 %v83, 127
    %v227 = vpop.permute.xlu0 %226
    %228 = vrot.lane.b32.xlu0 %v84, 127
    %v229 = vpop.permute.xlu0 %228
    %230 = vrot.lane.b32.xlu0 %v85, 127
    %v231 = vpop.permute.xlu0 %230
    %232 = vrot.lane.b32.xlu0 %v86, 127
    %v233 = vpop.permute.xlu0 %232
    %234 = vrot.lane.b32.xlu0 %v87, 127
    %v235 = vpop.permute.xlu0 %234
    %236 = vrot.lane.b32.xlu0 %v88, 127
    %v237 = vpop.permute.xlu0 %236
    %238 = vrot.lane.b32.xlu0 %v89, 127
    %v239 = vpop.permute.xlu0 %238
    %240 = vrot.lane.b32.xlu0 %v90, 127
    %v241 = vpop.permute.xlu0 %240
    %242 = vrot.lane.b32.xlu0 %v91, 127
    %v243 = vpop.permute.xlu0 %242
    %244 = vrot.lane.b32.xlu0 %v92, 127
    %v245 = vpop.permute.xlu0 %244
    %246 = vrot.lane.b32.xlu0 %v93, 127
    %v247 = vpop.permute.xlu0 %246
    %248 = vrot.lane.b32.xlu0 %v94, 127
    %v249 = vpop.permute.xlu0 %248
    %250 = vrot.lane.b32.xlu0 %v95, 127
    %v251 = vpop.permute.xlu0 %250
    %252 = vrot.lane.b32.xlu0 %v96, 127
    %v253 = vpop.permute.xlu0 %252
    %254 = vrot.lane.b32.xlu0 %v97, 127
    %v255 = vpop.permute.xlu0 %254
    %256 = vrot.lane.b32.xlu0 %v98, 127
    %v257 = vpop.permute.xlu0 %256
    %258 = vrot.lane.b32.xlu0 %v99, 127
    %v259 = vpop.permute.xlu0 %258
    %260 = vrot.lane.b32.xlu0 %v100, 127
    %v261 = vpop.permute.xlu0 %260
    %262 = vrot.lane.b32.xlu0 %v101, 127
    %v263 = vpop.permute.xlu0 %262
    %264 = vrot.lane.b32.xlu0 %v102, 127
    %v265 = vpop.permute.xlu0 %264
    %266 = vrot.lane.b32.xlu0 %v103, 127
    %v267 = vpop.permute.xlu0 %266
    %268 = vrot.lane.b32.xlu0 %v104, 127
    %v269 = vpop.permute.xlu0 %268
    %270 = vrot.lane.b32.xlu0 %v105, 127
    %v271 = vpop.permute.xlu0 %270
    %272 = vrot.lane.b32.xlu0 %v106, 127
    %v273 = vpop.permute.xlu0 %272
    %274 = vrot.lane.b32.xlu0 %v107, 127
    %v275 = vpop.permute.xlu0 %274
    %vm276 = vcmask 1039360
    %v277 = vsel %vm276, %v165, %v167
    %v278 = vsel %vm276, %v169, %v171
    %v279 = vsel %vm276, %v173, %v175
    %v280 = vsel %vm276, %v177, %v179
    %v281 = vsel %vm276, %v181, %v183
    %v282 = vsel %vm276, %v185, %v187
    %v283 = vsel %vm276, %v189, %v191
    %v284 = vsel %vm276, %v193, %v195
    %v285 = vsel %vm276, %v197, %v199
    %v286 = vsel %vm276, %v201, %v203
    %v287 = vsel %vm276, %v205, %v207
    %v288 = vsel %vm276, %v209, %v211
    %v289 = vsel %vm276, %v213, %v215
    %v290 = vsel %vm276, %v217, %v219
    %v291 = vsel %vm276, %v221, %v223
    %v292 = vsel %vm276, %v225, %v227
    %v293 = vsel %vm276, %v229, %v231
    %v294 = vsel %vm276, %v233, %v235
    %v295 = vsel %vm276, %v237, %v239
    %v296 = vsel %vm276, %v241, %v243
    %v297 = vsel %vm276, %v245, %v247
    %v298 = vsel %vm276, %v249, %v251
    %v299 = vsel %vm276, %v253, %v255
    %v300 = vsel %vm276, %v257, %v259
    %v301 = vsel %vm276, %v261, %v263
    %v302 = vsel %vm276, %v265, %v267
    %v303 = vsel %vm276, %v269, %v271
    %v304 = vsel %vm276, %v273, %v275
    %333 = vst [vmem:[#allocation2] sm:$0xff] %v277
    %334 = vst [vmem:[#allocation2 + $0x8] sm:$0xff] %v278
    %335 = vst [vmem:[#allocation2 + $0x10] sm:$0xff] %v279
    %336 = vst [vmem:[#allocation2 + $0x18] sm:$0xff] %v280
    %337 = vst [vmem:[#allocation2 + $0x20] sm:$0xff] %v281
    %338 = vst [vmem:[#allocation2 + $0x28] sm:$0xff] %v282
    %339 = vst [vmem:[#allocation2 + $0x30] sm:$0xff] %v283
    %340 = vst [vmem:[#allocation2 + $0x38] sm:$0xff] %v284
    %341 = vst [vmem:[#allocation2 + $0x40] sm:$0xff] %v285
    %342 = vst [vmem:[#allocation2 + $0x48] sm:$0xff] %v286
    %343 = vst [vmem:[#allocation2 + $0x50] sm:$0xff] %v287
    %344 = vst [vmem:[#allocation2 + $0x58] sm:$0xff] %v288
    %345 = vst [vmem:[#allocation2 + $0x60] sm:$0xff] %v289
    %346 = vst [vmem:[#allocation2 + $0x68] sm:$0xff] %v290
    %347 = vst [vmem:[#allocation2 + $0x70] sm:$0xff] %v291
    %348 = vst [vmem:[#allocation2 + $0x78] sm:$0xff] %v292
    %349 = vst [vmem:[#allocation2 + $0x80] sm:$0xff] %v293
    %350 = vst [vmem:[#allocation2 + $0x88] sm:$0xff] %v294
    %351 = vst [vmem:[#allocation2 + $0x90] sm:$0xff] %v295
    %352 = vst [vmem:[#allocation2 + $0x98] sm:$0xff] %v296
    %353 = vst [vmem:[#allocation2 + $0xa0] sm:$0xff] %v297
    %354 = vst [vmem:[#allocation2 + $0xa8] sm:$0xff] %v298
    %355 = vst [vmem:[#allocation2 + $0xb0] sm:$0xff] %v299
    %356 = vst [vmem:[#allocation2 + $0xb8] sm:$0xff] %v300
    %357 = vst [vmem:[#allocation2 + $0xc0] sm:$0xff] %v301
    %358 = vst [vmem:[#allocation2 + $0xc8] sm:$0xff] %v302
    %359 = vst [vmem:[#allocation2 + $0xd0] sm:$0xff] %v303
    %360 = vst [vmem:[#allocation2 + $0xd8] sm:$0xff] %v304
    %v361 = vld [vmem:[#allocation3] sm:$0xff]
    %v362 = vld [vmem:[#allocation3 + $0x8] sm:$0xff]
    %v363 = vld [vmem:[#allocation3 + $0x10] sm:$0xff]
    %v364 = vld [vmem:[#allocation3 + $0x18] sm:$0xff]
    %v365 = vld [vmem:[#allocation3 + $0x20] sm:$0xff]
    %v366 = vld [vmem:[#allocation3 + $0x28] sm:$0xff]
    %v367 = vld [vmem:[#allocation3 + $0x30] sm:$0xff]
    %v368 = vld [vmem:[#allocation3 + $0x38] sm:$0xff]
    %v369 = vld [vmem:[#allocation3 + $0x40] sm:$0xff]
    %v370 = vld [vmem:[#allocation3 + $0x48] sm:$0xff]
    %v371 = vld [vmem:[#allocation3 + $0x50] sm:$0xff]
    %v372 = vld [vmem:[#allocation3 + $0x58] sm:$0xff]
    %v373 = vld [vmem:[#allocation3 + $0x60] sm:$0xff]
    %v374 = vld [vmem:[#allocation3 + $0x68] sm:$0xff]
    %v375 = vld [vmem:[#allocation3 + $0x70] sm:$0xff]
    %v376 = vld [vmem:[#allocation3 + $0x78] sm:$0xff]
    %v377 = vld [vmem:[#allocation3 + $0x80] sm:$0xff]
    %v378 = vld [vmem:[#allocation3 + $0x88] sm:$0xff]
    %v379 = vld [vmem:[#allocation3 + $0x90] sm:$0xff]
    %v380 = vld [vmem:[#allocation3 + $0x98] sm:$0xff]
    %v381 = vld [vmem:[#allocation3 + $0xa0] sm:$0xff]
    %v382 = vld [vmem:[#allocation3 + $0xa8] sm:$0xff]
    %v383 = vld [vmem:[#allocation3 + $0xb0] sm:$0xff]
    %v384 = vld [vmem:[#allocation3 + $0xb8] sm:$0xff]
    %v385 = vld [vmem:[#allocation3 + $0xc0] sm:$0xff]
    %v386 = vld [vmem:[#allocation3 + $0xc8] sm:$0xff]
    %v387 = vld [vmem:[#allocation3 + $0xd0] sm:$0xff]
    %v388 = vld [vmem:[#allocation3 + $0xd8] sm:$0xff]
    %v389 = vld [vmem:[#allocation3 + $0xe0] sm:$0xff]
    %v390 = vld [vmem:[#allocation3 + $0xe8] sm:$0xff]
    %v391 = vld [vmem:[#allocation3 + $0xf0] sm:$0xff]
    %v392 = vld [vmem:[#allocation3 + $0xf8] sm:$0xff]
    %v393 = vld [vmem:[#allocation3 + $0x100] sm:$0xff]
    %v394 = vld [vmem:[#allocation3 + $0x108] sm:$0xff]
    %v395 = vld [vmem:[#allocation3 + $0x110] sm:$0xff]
    %v396 = vld [vmem:[#allocation3 + $0x118] sm:$0xff]
    %v397 = vld [vmem:[#allocation3 + $0x120] sm:$0xff]
    %v398 = vld [vmem:[#allocation3 + $0x128] sm:$0xff]
    %v399 = vld [vmem:[#allocation3 + $0x130] sm:$0xff]
    %v400 = vld [vmem:[#allocation3 + $0x138] sm:$0xff]
    %v401 = vld [vmem:[#allocation3 + $0x140] sm:$0xff]
    %v402 = vld [vmem:[#allocation3 + $0x148] sm:$0xff]
    %v403 = vld [vmem:[#allocation3 + $0x150] sm:$0xff]
    %v404 = vld [vmem:[#allocation3 + $0x158] sm:$0xff]
    %v405 = vld [vmem:[#allocation3 + $0x160] sm:$0xff]
    %v406 = vld [vmem:[#allocation3 + $0x168] sm:$0xff]
    %v407 = vld [vmem:[#allocation3 + $0x170] sm:$0xff]
    %v408 = vld [vmem:[#allocation3 + $0x178] sm:$0xff]
    %v409 = vld [vmem:[#allocation3 + $0x180] sm:$0xff]
    %v410 = vld [vmem:[#allocation3 + $0x188] sm:$0xff]
    %v411 = vld [vmem:[#allocation3 + $0x190] sm:$0xff]
    %v412 = vld [vmem:[#allocation3 + $0x198] sm:$0xff]
    %v413 = vld [vmem:[#allocation3 + $0x1a0] sm:$0xff]
    %v414 = vld [vmem:[#allocation3 + $0x1a8] sm:$0xff]
    %v415 = vld [vmem:[#allocation3 + $0x1b0] sm:$0xff]
    %v416 = vld [vmem:[#allocation3 + $0x1b8] sm:$0xff]
    %473 = vrot.lane.b32.xlu0 %v361, 126
    %v474 = vpop.permute.xlu0 %473
    %475 = vrot.lane.b32.xlu0 %v362, 126
    %v476 = vpop.permute.xlu0 %475
    %477 = vrot.lane.b32.xlu0 %v363, 126
    %v478 = vpop.permute.xlu0 %477
    %479 = vrot.lane.b32.xlu0 %v364, 126
    %v480 = vpop.permute.xlu0 %479
    %481 = vrot.lane.b32.xlu0 %v365, 126
    %v482 = vpop.permute.xlu0 %481
    %483 = vrot.lane.b32.xlu0 %v366, 126
    %v484 = vpop.permute.xlu0 %483
    %485 = vrot.lane.b32.xlu0 %v367, 126
    %v486 = vpop.permute.xlu0 %485
    %487 = vrot.lane.b32.xlu0 %v368, 126
    %v488 = vpop.permute.xlu0 %487
    %489 = vrot.lane.b32.xlu0 %v369, 126
    %v490 = vpop.permute.xlu0 %489
    %491 = vrot.lane.b32.xlu0 %v370, 126
    %v492 = vpop.permute.xlu0 %491
    %493 = vrot.lane.b32.xlu0 %v371, 126
    %v494 = vpop.permute.xlu0 %493
    %495 = vrot.lane.b32.xlu0 %v372, 126
    %v496 = vpop.permute.xlu0 %495
    %497 = vrot.lane.b32.xlu0 %v373, 126
    %v498 = vpop.permute.xlu0 %497
    %499 = vrot.lane.b32.xlu0 %v374, 126
    %v500 = vpop.permute.xlu0 %499
    %501 = vrot.lane.b32.xlu0 %v375, 126
    %v502 = vpop.permute.xlu0 %501
    %503 = vrot.lane.b32.xlu0 %v376, 126
    %v504 = vpop.permute.xlu0 %503
    %505 = vrot.lane.b32.xlu0 %v377, 126
    %v506 = vpop.permute.xlu0 %505
    %507 = vrot.lane.b32.xlu0 %v378, 126
    %v508 = vpop.permute.xlu0 %507
    %509 = vrot.lane.b32.xlu0 %v379, 126
    %v510 = vpop.permute.xlu0 %509
    %511 = vrot.lane.b32.xlu0 %v380, 126
    %v512 = vpop.permute.xlu0 %511
    %513 = vrot.lane.b32.xlu0 %v381, 126
    %v514 = vpop.permute.xlu0 %513
    %515 = vrot.lane.b32.xlu0 %v382, 126
    %v516 = vpop.permute.xlu0 %515
    %517 = vrot.lane.b32.xlu0 %v383, 126
    %v518 = vpop.permute.xlu0 %517
    %519 = vrot.lane.b32.xlu0 %v384, 126
    %v520 = vpop.permute.xlu0 %519
    %521 = vrot.lane.b32.xlu0 %v385, 126
    %v522 = vpop.permute.xlu0 %521
    %523 = vrot.lane.b32.xlu0 %v386, 126
    %v524 = vpop.permute.xlu0 %523
    %525 = vrot.lane.b32.xlu0 %v387, 126
    %v526 = vpop.permute.xlu0 %525
    %527 = vrot.lane.b32.xlu0 %v388, 126
    %v528 = vpop.permute.xlu0 %527
    %529 = vrot.lane.b32.xlu0 %v389, 126
    %v530 = vpop.permute.xlu0 %529
    %531 = vrot.lane.b32.xlu0 %v390, 126
    %v532 = vpop.permute.xlu0 %531
    %533 = vrot.lane.b32.xlu0 %v391, 126
    %v534 = vpop.permute.xlu0 %533
    %535 = vrot.lane.b32.xlu0 %v392, 126
    %v536 = vpop.permute.xlu0 %535
    %537 = vrot.lane.b32.xlu0 %v393, 126
    %v538 = vpop.permute.xlu0 %537
    %539 = vrot.lane.b32.xlu0 %v394, 126
    %v540 = vpop.permute.xlu0 %539
    %541 = vrot.lane.b32.xlu0 %v395, 126
    %v542 = vpop.permute.xlu0 %541
    %543 = vrot.lane.b32.xlu0 %v396, 126
    %v544 = vpop.permute.xlu0 %543
    %545 = vrot.lane.b32.xlu0 %v397, 126
    %v546 = vpop.permute.xlu0 %545
    %547 = vrot.lane.b32.xlu0 %v398, 126
    %v548 = vpop.permute.xlu0 %547
    %549 = vrot.lane.b32.xlu0 %v399, 126
    %v550 = vpop.permute.xlu0 %549
    %551 = vrot.lane.b32.xlu0 %v400, 126
    %v552 = vpop.permute.xlu0 %551
    %553 = vrot.lane.b32.xlu0 %v401, 126
    %v554 = vpop.permute.xlu0 %553
    %555 = vrot.lane.b32.xlu0 %v402, 126
    %v556 = vpop.permute.xlu0 %555
    %557 = vrot.lane.b32.xlu0 %v403, 126
    %v558 = vpop.permute.xlu0 %557
    %559 = vrot.lane.b32.xlu0 %v404, 126
    %v560 = vpop.permute.xlu0 %559
    %561 = vrot.lane.b32.xlu0 %v405, 126
    %v562 = vpop.permute.xlu0 %561
    %563 = vrot.lane.b32.xlu0 %v406, 126
    %v564 = vpop.permute.xlu0 %563
    %565 = vrot.lane.b32.xlu0 %v407, 126
    %v566 = vpop.permute.xlu0 %565
    %567 = vrot.lane.b32.xlu0 %v408, 126
    %v568 = vpop.permute.xlu0 %567
    %569 = vrot.lane.b32.xlu0 %v409, 126
    %v570 = vpop.permute.xlu0 %569
    %571 = vrot.lane.b32.xlu0 %v410, 126
    %v572 = vpop.permute.xlu0 %571
    %573 = vrot.lane.b32.xlu0 %v411, 126
    %v574 = vpop.permute.xlu0 %573
    %575 = vrot.lane.b32.xlu0 %v412, 126
    %v576 = vpop.permute.xlu0 %575
    %577 = vrot.lane.b32.xlu0 %v413, 126
    %v578 = vpop.permute.xlu0 %577
    %579 = vrot.lane.b32.xlu0 %v414, 126
    %v580 = vpop.permute.xlu0 %579
    %581 = vrot.lane.b32.xlu0 %v415, 126
    %v582 = vpop.permute.xlu0 %581
    %583 = vrot.lane.b32.xlu0 %v416, 126
    %v584 = vpop.permute.xlu0 %583
    %vm585 = vcmask 1031168
    %v586 = vsel %vm585, %v474, %v476
    %v587 = vsel %vm585, %v478, %v480
    %v588 = vsel %vm585, %v482, %v484
    %v589 = vsel %vm585, %v486, %v488
    %v590 = vsel %vm585, %v490, %v492
    %v591 = vsel %vm585, %v494, %v496
    %v592 = vsel %vm585, %v498, %v500
    %v593 = vsel %vm585, %v502, %v504
    %v594 = vsel %vm585, %v506, %v508
    %v595 = vsel %vm585, %v510, %v512
    %v596 = vsel %vm585, %v514, %v516
    %v597 = vsel %vm585, %v518, %v520
    %v598 = vsel %vm585, %v522, %v524
    %v599 = vsel %vm585, %v526, %v528
    %v600 = vsel %vm585, %v530, %v532
    %v601 = vsel %vm585, %v534, %v536
    %v602 = vsel %vm585, %v538, %v540
    %v603 = vsel %vm585, %v542, %v544
    %v604 = vsel %vm585, %v546, %v548
    %v605 = vsel %vm585, %v550, %v552
    %v606 = vsel %vm585, %v554, %v556
    %v607 = vsel %vm585, %v558, %v560
    %v608 = vsel %vm585, %v562, %v564
    %v609 = vsel %vm585, %v566, %v568
    %v610 = vsel %vm585, %v570, %v572
    %v611 = vsel %vm585, %v574, %v576
    %v612 = vsel %vm585, %v578, %v580
    %v613 = vsel %vm585, %v582, %v584
    %s642 = scalar_lea.vmem [#allocation2], 224
    %643 = vst [vmem:[%s642] sm:$0xff] %v586
    %644 = vst [vmem:[%s642 + $0x8] sm:$0xff] %v587
    %645 = vst [vmem:[%s642 + $0x10] sm:$0xff] %v588
    %646 = vst [vmem:[%s642 + $0x18] sm:$0xff] %v589
    %647 = vst [vmem:[%s642 + $0x20] sm:$0xff] %v590
    %648 = vst [vmem:[%s642 + $0x28] sm:$0xff] %v591
    %649 = vst [vmem:[%s642 + $0x30] sm:$0xff] %v592
    %650 = vst [vmem:[%s642 + $0x38] sm:$0xff] %v593
    %651 = vst [vmem:[%s642 + $0x40] sm:$0xff] %v594
    %652 = vst [vmem:[%s642 + $0x48] sm:$0xff] %v595
    %653 = vst [vmem:[%s642 + $0x50] sm:$0xff] %v596
    %654 = vst [vmem:[%s642 + $0x58] sm:$0xff] %v597
    %655 = vst [vmem:[%s642 + $0x60] sm:$0xff] %v598
    %656 = vst [vmem:[%s642 + $0x68] sm:$0xff] %v599
    %657 = vst [vmem:[%s642 + $0x70] sm:$0xff] %v600
    %658 = vst [vmem:[%s642 + $0x78] sm:$0xff] %v601
    %659 = vst [vmem:[%s642 + $0x80] sm:$0xff] %v602
    %660 = vst [vmem:[%s642 + $0x88] sm:$0xff] %v603
    %661 = vst [vmem:[%s642 + $0x90] sm:$0xff] %v604
    %662 = vst [vmem:[%s642 + $0x98] sm:$0xff] %v605
    %663 = vst [vmem:[%s642 + $0xa0] sm:$0xff] %v606
    %664 = vst [vmem:[%s642 + $0xa8] sm:$0xff] %v607
    %665 = vst [vmem:[%s642 + $0xb0] sm:$0xff] %v608
    %666 = vst [vmem:[%s642 + $0xb8] sm:$0xff] %v609
    %667 = vst [vmem:[%s642 + $0xc0] sm:$0xff] %v610
    %668 = vst [vmem:[%s642 + $0xc8] sm:$0xff] %v611
    %669 = vst [vmem:[%s642 + $0xd0] sm:$0xff] %v612
    %670 = vst [vmem:[%s642 + $0xd8] sm:$0xff] %v613
    %v671 = vld [vmem:[%s7] sm:$0xff]
    %v672 = vld [vmem:[%s8] sm:$0xff]
    %v673 = vld [vmem:[%s9] sm:$0xff]
    %v674 = vld [vmem:[%s4] sm:$0xff]
    %v675 = vld [vmem:[%s5] sm:$0xff]
    %v676 = vld [vmem:[%s6] sm:$0xff]
    loop: start=0, step=1, limit=11
    $region46: #{tpu_custom_call.1} parent=1 // loop_pre_header
      _
    $region47: #{tpu_custom_call.1} parent=1 // loop_header
      %s678 = sphi 0, %s682
      %p679 = scmp.ge.s32.totalorder %s678, 11
    $region48: #{tpu_custom_call.1} parent=1 // loop_header_branch
      %681 = sbr.rel (%p679) target = $region52
    $region49: #{tpu_custom_call.1} parent=1 // loop_body
      %s683 = smul.u32 %s678, 2
      %s684 = smul.addr %s683, 8
      %s685 = scalar_lea.vmem [#allocation3], %s684
      %v686 = vld [vmem:[%s685] sm:$0xff]
      %v687 = vld [vmem:[%s3] sm:$0xff]
      %689 = vset.pattern.permute.xlu0 0
      %690 = vperm.xlu0 %689, %v687
      %v691 = vpop.permute.xlu0 %690
      %v693 = vmul.f32 %v686, %v691
      %v694 = vadd.f32 %v693, 0.0
      %s695 = smul.u32 %s678, 8
      %s696 = scalar_lea.vmem [#allocation2], %s695
      %v697 = vld [vmem:[%s696] sm:$0xff]
      %698 = vset.pattern.permute.xlu0 1
      %699 = vperm.xlu0 %698, %v687
      %v700 = vpop.permute.xlu0 %699
      %v702 = vmul.f32 %v697, %v700
      %v703 = vadd.f32 %v702, 0.0
      %s704 = sadd.s32 %s678, 28
      %s705 = smul.u32 %s704, 8
      %s706 = scalar_lea.vmem [#allocation2], %s705
      %v707 = vld [vmem:[%s706] sm:$0xff]
      %708 = vset.pattern.permute.xlu0 2
      %709 = vperm.xlu0 %708, %v687
      %v710 = vpop.permute.xlu0 %709
      %v712 = vmul.f32 %v707, %v710
      %v713 = vadd.f32 %v694, %v712
      %s714 = sadd.s32 %s678, 1
      %s715 = smul.u32 %s714, 2
      %s716 = smul.addr %s715, 8
      %s717 = scalar_lea.vmem [#allocation3], %s716
      %v718 = vld [vmem:[%s717] sm:$0xff]
      %719 = vset.pattern.permute.xlu0 3
      %720 = vperm.xlu0 %719, %v687
      %v721 = vpop.permute.xlu0 %720
      %v723 = vmul.f32 %v718, %v721
      %v724 = vadd.f32 %v703, %v723
      %s725 = smul.u32 %s714, 8
      %s726 = scalar_lea.vmem [#allocation2], %s725
      %v727 = vld [vmem:[%s726] sm:$0xff]
      %728 = vset.pattern.permute.xlu0 4
      %729 = vperm.xlu0 %728, %v687
      %v730 = vpop.permute.xlu0 %729
      %v732 = vmul.f32 %v727, %v730
      %v733 = vadd.f32 %v713, %v732
      %s734 = sadd.s32 %s678, 29
      %s735 = smul.u32 %s734, 8
      %s736 = scalar_lea.vmem [#allocation2], %s735
      %v737 = vld [vmem:[%s736] sm:$0xff]
      %738 = vset.pattern.permute.xlu0 5
      %739 = vperm.xlu0 %738, %v687
      %v740 = vpop.permute.xlu0 %739
      %v742 = vmul.f32 %v737, %v740
      %v743 = vadd.f32 %v724, %v742
      %s744 = sadd.s32 %s678, 2
      %s745 = smul.u32 %s744, 2
      %s746 = smul.addr %s745, 8
      %s747 = scalar_lea.vmem [#allocation3], %s746
      %v748 = vld [vmem:[%s747] sm:$0xff]
      %749 = vset.pattern.permute.xlu0 6
      %750 = vperm.xlu0 %749, %v687
      %v751 = vpop.permute.xlu0 %750
      %v753 = vmul.f32 %v748, %v751
      %v754 = vadd.f32 %v733, %v753
      %s755 = smul.u32 %s744, 8
      %s756 = scalar_lea.vmem [#allocation2], %s755
      %v757 = vld [vmem:[%s756] sm:$0xff]
      %758 = vset.pattern.permute.xlu0 7
      %759 = vperm.xlu0 %758, %v687
      %v760 = vpop.permute.xlu0 %759
      %v762 = vmul.f32 %v757, %v760
      %v763 = vadd.f32 %v743, %v762
      %s764 = sadd.s32 %s678, 30
      %s765 = smul.u32 %s764, 8
      %s766 = scalar_lea.vmem [#allocation2], %s765
      %v767 = vld [vmem:[%s766] sm:$0xff]
      %768 = vset.pattern.permute.xlu0 8
      %769 = vperm.xlu0 %768, %v687
      %v770 = vpop.permute.xlu0 %769
      %v772 = vmul.f32 %v767, %v770
      %v773 = vadd.f32 %v754, %v772
      %s774 = sadd.s32 %s678, 3
      %s775 = smul.u32 %s774, 2
      %s776 = smul.addr %s775, 8
      %s777 = scalar_lea.vmem [#allocation3], %s776
      %v778 = vld [vmem:[%s777] sm:$0xff]
      %779 = vset.pattern.permute.xlu0 9
      %780 = vperm.xlu0 %779, %v687
      %v781 = vpop.permute.xlu0 %780
      %v783 = vmul.f32 %v778, %v781
      %v784 = vadd.f32 %v763, %v783
      %v785 = vld [vmem:[%s2] sm:$0xff]
      %787 = vset.pattern.permute.xlu0 0
      %788 = vperm.xlu0 %787, %v785
      %v789 = vpop.permute.xlu0 %788
      %v791 = vmul.f32 %v778, %v789
      %v792 = vadd.f32 %v791, 0.0
      %s793 = smul.u32 %s774, 8
      %s794 = scalar_lea.vmem [#allocation2], %s793
      %v795 = vld [vmem:[%s794] sm:$0xff]
      %796 = vset.pattern.permute.xlu0 10
      %797 = vperm.xlu0 %796, %v687
      %v798 = vpop.permute.xlu0 %797
      %v800 = vmul.f32 %v795, %v798
      %v801 = vadd.f32 %v773, %v800
      %802 = vset.pattern.permute.xlu0 1
      %803 = vperm.xlu0 %802, %v785
      %v804 = vpop.permute.xlu0 %803
      %v806 = vmul.f32 %v795, %v804
      %v807 = vadd.f32 %v806, 0.0
      %s808 = sadd.s32 %s678, 31
      %s809 = smul.u32 %s808, 8
      %s810 = scalar_lea.vmem [#allocation2], %s809
      %v811 = vld [vmem:[%s810] sm:$0xff]
      %812 = vset.pattern.permute.xlu0 11
      %813 = vperm.xlu0 %812, %v687
      %v814 = vpop.permute.xlu0 %813
      %v816 = vmul.f32 %v811, %v814
      %v817 = vadd.f32 %v784, %v816
      %818 = vset.pattern.permute.xlu0 2
      %819 = vperm.xlu0 %818, %v785
      %v820 = vpop.permute.xlu0 %819
      %v822 = vmul.f32 %v811, %v820
      %v823 = vadd.f32 %v792, %v822
      %s824 = sadd.s32 %s678, 4
      %s825 = smul.u32 %s824, 2
      %s826 = smul.addr %s825, 8
      %s827 = scalar_lea.vmem [#allocation3], %s826
      %v828 = vld [vmem:[%s827] sm:$0xff]
      %829 = vset.pattern.permute.xlu0 12
      %830 = vperm.xlu0 %829, %v687
      %v831 = vpop.permute.xlu0 %830
      %v833 = vmul.f32 %v828, %v831
      %v834 = vadd.f32 %v801, %v833
      %835 = vset.pattern.permute.xlu0 3
      %836 = vperm.xlu0 %835, %v785
      %v837 = vpop.permute.xlu0 %836
      %v839 = vmul.f32 %v828, %v837
      %v840 = vadd.f32 %v807, %v839
      %s841 = smul.u32 %s824, 8
      %s842 = scalar_lea.vmem [#allocation2], %s841
      %v843 = vld [vmem:[%s842] sm:$0xff]
      %844 = vset.pattern.permute.xlu0 13
      %845 = vperm.xlu0 %844, %v687
      %v846 = vpop.permute.xlu0 %845
      %v848 = vmul.f32 %v843, %v846
      %v849 = vadd.f32 %v817, %v848
      %850 = vset.pattern.permute.xlu0 4
      %851 = vperm.xlu0 %850, %v785
      %v852 = vpop.permute.xlu0 %851
      %v854 = vmul.f32 %v843, %v852
      %v855 = vadd.f32 %v823, %v854
      %s856 = sadd.s32 %s678, 32
      %s857 = smul.u32 %s856, 8
      %s858 = scalar_lea.vmem [#allocation2], %s857
      %v859 = vld [vmem:[%s858] sm:$0xff]
      %860 = vset.pattern.permute.xlu0 14
      %861 = vperm.xlu0 %860, %v687
      %v862 = vpop.permute.xlu0 %861
      %v864 = vmul.f32 %v859, %v862
      %v865 = vadd.f32 %v834, %v864
      %866 = vset.pattern.permute.xlu0 5
      %867 = vperm.xlu0 %866, %v785
      %v868 = vpop.permute.xlu0 %867
      %v870 = vmul.f32 %v859, %v868
      %v871 = vadd.f32 %v840, %v870
      %s872 = sadd.s32 %s678, 5
      %s873 = smul.u32 %s872, 2
      %s874 = smul.addr %s873, 8
      %s875 = scalar_lea.vmem [#allocation3], %s874
      %v876 = vld [vmem:[%s875] sm:$0xff]
      %877 = vset.pattern.permute.xlu0 15
      %878 = vperm.xlu0 %877, %v687
      %v879 = vpop.permute.xlu0 %878
      %v881 = vmul.f32 %v876, %v879
      %v882 = vadd.f32 %v849, %v881
      %883 = vset.pattern.permute.xlu0 6
      %884 = vperm.xlu0 %883, %v785
      %v885 = vpop.permute.xlu0 %884
      %v887 = vmul.f32 %v876, %v885
      %v888 = vadd.f32 %v855, %v887
      %s889 = smul.u32 %s872, 8
      %s890 = scalar_lea.vmem [#allocation2], %s889
      %v891 = vld [vmem:[%s890] sm:$0xff]
      %892 = vset.pattern.permute.xlu0 16
      %893 = vperm.xlu0 %892, %v687
      %v894 = vpop.permute.xlu0 %893
      %v896 = vmul.f32 %v891, %v894
      %v897 = vadd.f32 %v865, %v896
      %898 = vset.pattern.permute.xlu0 7
      %899 = vperm.xlu0 %898, %v785
      %v900 = vpop.permute.xlu0 %899
      %v902 = vmul.f32 %v891, %v900
      %v903 = vadd.f32 %v871, %v902
      %s904 = sadd.s32 %s678, 33
      %s905 = smul.u32 %s904, 8
      %s906 = scalar_lea.vmem [#allocation2], %s905
      %v907 = vld [vmem:[%s906] sm:$0xff]
      %908 = vset.pattern.permute.xlu0 17
      %909 = vperm.xlu0 %908, %v687
      %v910 = vpop.permute.xlu0 %909
      %v912 = vmul.f32 %v907, %v910
      %v913 = vadd.f32 %v882, %v912
      %914 = vset.pattern.permute.xlu0 8
      %915 = vperm.xlu0 %914, %v785
      %v916 = vpop.permute.xlu0 %915
      %v918 = vmul.f32 %v907, %v916
      %v919 = vadd.f32 %v888, %v918
      %s920 = sadd.s32 %s678, 6
      %s921 = smul.u32 %s920, 2
      %s922 = smul.addr %s921, 8
      %s923 = scalar_lea.vmem [#allocation3], %s922
      %v924 = vld [vmem:[%s923] sm:$0xff]
      %925 = vset.pattern.permute.xlu0 18
      %926 = vperm.xlu0 %925, %v687
      %v927 = vpop.permute.xlu0 %926
      %v929 = vmul.f32 %v924, %v927
      %v930 = vadd.f32 %v897, %v929
      %931 = vset.pattern.permute.xlu0 9
      %932 = vperm.xlu0 %931, %v785
      %v933 = vpop.permute.xlu0 %932
      %v935 = vmul.f32 %v924, %v933
      %v936 = vadd.f32 %v903, %v935
      %v937 = vld [vmem:[%s1] sm:$0xff]
      %939 = vset.pattern.permute.xlu0 0
      %940 = vperm.xlu0 %939, %v937
      %v941 = vpop.permute.xlu0 %940
      %v943 = vmul.f32 %v924, %v941
      %v944 = vadd.f32 %v943, 0.0
      %s945 = smul.u32 %s920, 8
      %s946 = scalar_lea.vmem [#allocation2], %s945
      %v947 = vld [vmem:[%s946] sm:$0xff]
      %948 = vset.pattern.permute.xlu0 19
      %949 = vperm.xlu0 %948, %v687
      %v950 = vpop.permute.xlu0 %949
      %v952 = vmul.f32 %v947, %v950
      %v953 = vadd.f32 %v913, %v952
      %954 = vset.pattern.permute.xlu0 10
      %955 = vperm.xlu0 %954, %v785
      %v956 = vpop.permute.xlu0 %955
      %v958 = vmul.f32 %v947, %v956
      %v959 = vadd.f32 %v919, %v958
      %960 = vset.pattern.permute.xlu0 1
      %961 = vperm.xlu0 %960, %v937
      %v962 = vpop.permute.xlu0 %961
      %v964 = vmul.f32 %v947, %v962
      %v965 = vadd.f32 %v944, %v964
      %v966 = vmax.f32 %v924, %v947
      %s967 = sadd.s32 %s678, 34
      %s968 = smul.u32 %s967, 8
      %s969 = scalar_lea.vmem [#allocation2], %s968
      %v970 = vld [vmem:[%s969] sm:$0xff]
      %971 = vset.pattern.permute.xlu0 20
      %972 = vperm.xlu0 %971, %v687
      %v973 = vpop.permute.xlu0 %972
      %v975 = vmul.f32 %v970, %v973
      %v976 = vadd.f32 %v930, %v975
      %977 = vset.pattern.permute.xlu0 11
      %978 = vperm.xlu0 %977, %v785
      %v979 = vpop.permute.xlu0 %978
      %v981 = vmul.f32 %v970, %v979
      %v982 = vadd.f32 %v936, %v981
      %983 = vset.pattern.permute.xlu0 2
      %984 = vperm.xlu0 %983, %v937
      %v985 = vpop.permute.xlu0 %984
      %v987 = vmul.f32 %v970, %v985
      %v988 = vadd.f32 %v965, %v987
      %v989 = vmax.f32 %v966, %v970
      %s990 = sadd.s32 %s678, 7
      %s991 = smul.u32 %s990, 2
      %s992 = smul.addr %s991, 8
      %s993 = scalar_lea.vmem [#allocation3], %s992
      %v994 = vld [vmem:[%s993] sm:$0xff]
      %995 = vset.pattern.permute.xlu0 21
      %996 = vperm.xlu0 %995, %v687
      %v997 = vpop.permute.xlu0 %996
      %v999 = vmul.f32 %v994, %v997
      %v1000 = vadd.f32 %v953, %v999
      %1001 = vset.pattern.permute.xlu0 12
      %1002 = vperm.xlu0 %1001, %v785
      %v1003 = vpop.permute.xlu0 %1002
      %v1005 = vmul.f32 %v994, %v1003
      %v1006 = vadd.f32 %v959, %v1005
      %1007 = vset.pattern.permute.xlu0 3
      %1008 = vperm.xlu0 %1007, %v937
      %v1009 = vpop.permute.xlu0 %1008
      %v1011 = vmul.f32 %v994, %v1009
      %v1012 = vadd.f32 %v988, %v1011
      %v1013 = vmax.f32 %v989, %v994
      %s1014 = smul.u32 %s990, 8
      %s1015 = scalar_lea.vmem [#allocation2], %s1014
      %v1016 = vld [vmem:[%s1015] sm:$0xff]
      %1017 = vset.pattern.permute.xlu0 22
      %1018 = vperm.xlu0 %1017, %v687
      %v1019 = vpop.permute.xlu0 %1018
      %v1021 = vmul.f32 %v1016, %v1019
      %v1022 = vadd.f32 %v976, %v1021
      %1023 = vset.pattern.permute.xlu0 13
      %1024 = vperm.xlu0 %1023, %v785
      %v1025 = vpop.permute.xlu0 %1024
      %v1027 = vmul.f32 %v1016, %v1025
      %v1028 = vadd.f32 %v982, %v1027
      %1029 = vset.pattern.permute.xlu0 4
      %1030 = vperm.xlu0 %1029, %v937
      %v1031 = vpop.permute.xlu0 %1030
      %v1033 = vmul.f32 %v1016, %v1031
      %v1034 = vadd.f32 %v1012, %v1033
      %v1035 = vmax.f32 %v1013, %v1016
      %s1036 = sadd.s32 %s678, 35
      %s1037 = smul.u32 %s1036, 8
      %s1038 = scalar_lea.vmem [#allocation2], %s1037
      %v1039 = vld [vmem:[%s1038] sm:$0xff]
      %1040 = vset.pattern.permute.xlu0 23
      %1041 = vperm.xlu0 %1040, %v687
      %v1042 = vpop.permute.xlu0 %1041
      %v1044 = vmul.f32 %v1039, %v1042
      %v1045 = vadd.f32 %v1000, %v1044
      %1046 = vset.pattern.permute.xlu0 14
      %1047 = vperm.xlu0 %1046, %v785
      %v1048 = vpop.permute.xlu0 %1047
      %v1050 = vmul.f32 %v1039, %v1048
      %v1051 = vadd.f32 %v1006, %v1050
      %1052 = vset.pattern.permute.xlu0 5
      %1053 = vperm.xlu0 %1052, %v937
      %v1054 = vpop.permute.xlu0 %1053
      %v1056 = vmul.f32 %v1039, %v1054
      %v1057 = vadd.f32 %v1034, %v1056
      %v1058 = vmax.f32 %v1035, %v1039
      %s1059 = sadd.s32 %s678, 8
      %s1060 = smul.u32 %s1059, 2
      %s1061 = smul.addr %s1060, 8
      %s1062 = scalar_lea.vmem [#allocation3], %s1061
      %v1063 = vld [vmem:[%s1062] sm:$0xff]
      %1064 = vset.pattern.permute.xlu0 24
      %1065 = vperm.xlu0 %1064, %v687
      %v1066 = vpop.permute.xlu0 %1065
      %v1068 = vmul.f32 %v1063, %v1066
      %v1069 = vadd.f32 %v1022, %v1068
      %1070 = vset.pattern.permute.xlu0 15
      %1071 = vperm.xlu0 %1070, %v785
      %v1072 = vpop.permute.xlu0 %1071
      %v1074 = vmul.f32 %v1063, %v1072
      %v1075 = vadd.f32 %v1028, %v1074
      %1076 = vset.pattern.permute.xlu0 6
      %1077 = vperm.xlu0 %1076, %v937
      %v1078 = vpop.permute.xlu0 %1077
      %v1080 = vmul.f32 %v1063, %v1078
      %v1081 = vadd.f32 %v1057, %v1080
      %v1082 = vmax.f32 %v1058, %v1063
      %s1083 = smul.u32 %s1059, 8
      %s1084 = scalar_lea.vmem [#allocation2], %s1083
      %v1085 = vld [vmem:[%s1084] sm:$0xff]
      %1086 = vset.pattern.permute.xlu0 25
      %1087 = vperm.xlu0 %1086, %v687
      %v1088 = vpop.permute.xlu0 %1087
      %v1090 = vmul.f32 %v1085, %v1088
      %v1091 = vadd.f32 %v1045, %v1090
      %1092 = vset.pattern.permute.xlu0 16
      %1093 = vperm.xlu0 %1092, %v785
      %v1094 = vpop.permute.xlu0 %1093
      %v1096 = vmul.f32 %v1085, %v1094
      %v1097 = vadd.f32 %v1051, %v1096
      %1098 = vset.pattern.permute.xlu0 7
      %1099 = vperm.xlu0 %1098, %v937
      %v1100 = vpop.permute.xlu0 %1099
      %v1102 = vmul.f32 %v1085, %v1100
      %v1103 = vadd.f32 %v1081, %v1102
      %v1104 = vmax.f32 %v1082, %v1085
      %s1105 = sadd.s32 %s678, 36
      %s1106 = smul.u32 %s1105, 8
      %s1107 = scalar_lea.vmem [#allocation2], %s1106
      %v1108 = vld [vmem:[%s1107] sm:$0xff]
      %1109 = vset.pattern.permute.xlu0 26
      %1110 = vperm.xlu0 %1109, %v687
      %v1111 = vpop.permute.xlu0 %1110
      %v1113 = vmul.f32 %v1108, %v1111
      %v1114 = vadd.f32 %v1069, %v1113
      %1115 = vset.pattern.permute.xlu0 17
      %1116 = vperm.xlu0 %1115, %v785
      %v1117 = vpop.permute.xlu0 %1116
      %v1119 = vmul.f32 %v1108, %v1117
      %v1120 = vadd.f32 %v1075, %v1119
      %1121 = vset.pattern.permute.xlu0 8
      %1122 = vperm.xlu0 %1121, %v937
      %v1123 = vpop.permute.xlu0 %1122
      %v1125 = vmul.f32 %v1108, %v1123
      %v1126 = vadd.f32 %v1103, %v1125
      %v1127 = vmax.f32 %v1104, %v1108
      %s1128 = sadd.s32 %s678, 9
      %s1129 = smul.u32 %s1128, 2
      %s1130 = smul.addr %s1129, 8
      %s1131 = scalar_lea.vmem [#allocation3], %s1130
      %v1132 = vld [vmem:[%s1131] sm:$0xff]
      %1133 = vset.pattern.permute.xlu0 27
      %1134 = vperm.xlu0 %1133, %v687
      %v1135 = vpop.permute.xlu0 %1134
      %v1137 = vmul.f32 %v1132, %v1135
      %v1138 = vadd.f32 %v1091, %v1137
      %1139 = vset.pattern.permute.xlu0 18
      %1140 = vperm.xlu0 %1139, %v785
      %v1141 = vpop.permute.xlu0 %1140
      %v1143 = vmul.f32 %v1132, %v1141
      %v1144 = vadd.f32 %v1097, %v1143
      %1145 = vset.pattern.permute.xlu0 9
      %1146 = vperm.xlu0 %1145, %v937
      %v1147 = vpop.permute.xlu0 %1146
      %v1149 = vmul.f32 %v1132, %v1147
      %v1150 = vadd.f32 %v1126, %v1149
      %v1151 = vmax.f32 %v1127, %v1132
      %s1152 = smul.u32 %s1128, 8
      %s1153 = scalar_lea.vmem [#allocation2], %s1152
      %v1154 = vld [vmem:[%s1153] sm:$0xff]
      %1155 = vset.pattern.permute.xlu0 28
      %1156 = vperm.xlu0 %1155, %v687
      %v1157 = vpop.permute.xlu0 %1156
      %v1159 = vmul.f32 %v1154, %v1157
      %v1160 = vadd.f32 %v1114, %v1159
      %1161 = vset.pattern.permute.xlu0 19
      %1162 = vperm.xlu0 %1161, %v785
      %v1163 = vpop.permute.xlu0 %1162
      %v1165 = vmul.f32 %v1154, %v1163
      %v1166 = vadd.f32 %v1120, %v1165
      %1167 = vset.pattern.permute.xlu0 10
      %1168 = vperm.xlu0 %1167, %v937
      %v1169 = vpop.permute.xlu0 %1168
      %v1171 = vmul.f32 %v1154, %v1169
      %v1172 = vadd.f32 %v1150, %v1171
      %v1173 = vmax.f32 %v1151, %v1154
      %s1174 = sadd.s32 %s678, 37
      %s1175 = smul.u32 %s1174, 8
      %s1176 = scalar_lea.vmem [#allocation2], %s1175
      %v1177 = vld [vmem:[%s1176] sm:$0xff]
      %1178 = vset.pattern.permute.xlu0 29
      %1179 = vperm.xlu0 %1178, %v687
      %v1180 = vpop.permute.xlu0 %1179
      %v1182 = vmul.f32 %v1177, %v1180
      %v1183 = vadd.f32 %v1138, %v1182
      %1184 = vset.pattern.permute.xlu0 20
      %1185 = vperm.xlu0 %1184, %v785
      %v1186 = vpop.permute.xlu0 %1185
      %v1188 = vmul.f32 %v1177, %v1186
      %v1189 = vadd.f32 %v1144, %v1188
      %1190 = vset.pattern.permute.xlu0 11
      %1191 = vperm.xlu0 %1190, %v937
      %v1192 = vpop.permute.xlu0 %1191
      %v1194 = vmul.f32 %v1177, %v1192
      %v1195 = vadd.f32 %v1172, %v1194
      %v1196 = vmax.f32 %v1173, %v1177
      %s1197 = sadd.s32 %s678, 10
      %s1198 = smul.u32 %s1197, 2
      %s1199 = smul.addr %s1198, 8
      %s1200 = scalar_lea.vmem [#allocation3], %s1199
      %v1201 = vld [vmem:[%s1200] sm:$0xff]
      %1202 = vset.pattern.permute.xlu0 30
      %1203 = vperm.xlu0 %1202, %v687
      %v1204 = vpop.permute.xlu0 %1203
      %v1206 = vmul.f32 %v1201, %v1204
      %v1207 = vadd.f32 %v1160, %v1206
      %1208 = vset.pattern.permute.xlu0 21
      %1209 = vperm.xlu0 %1208, %v785
      %v1210 = vpop.permute.xlu0 %1209
      %v1212 = vmul.f32 %v1201, %v1210
      %v1213 = vadd.f32 %v1166, %v1212
      %1214 = vset.pattern.permute.xlu0 12
      %1215 = vperm.xlu0 %1214, %v937
      %v1216 = vpop.permute.xlu0 %1215
      %v1218 = vmul.f32 %v1201, %v1216
      %v1219 = vadd.f32 %v1195, %v1218
      %v1220 = vmax.f32 %v1196, %v1201
      %s1221 = smul.u32 %s1197, 8
      %s1222 = scalar_lea.vmem [#allocation2], %s1221
      %v1223 = vld [vmem:[%s1222] sm:$0xff]
      %1224 = vset.pattern.permute.xlu0 31
      %1225 = vperm.xlu0 %1224, %v687
      %v1226 = vpop.permute.xlu0 %1225
      %v1228 = vmul.f32 %v1223, %v1226
      %v1229 = vadd.f32 %v1183, %v1228
      %1230 = vset.pattern.permute.xlu0 22
      %1231 = vperm.xlu0 %1230, %v785
      %v1232 = vpop.permute.xlu0 %1231
      %v1234 = vmul.f32 %v1223, %v1232
      %v1235 = vadd.f32 %v1189, %v1234
      %1236 = vset.pattern.permute.xlu0 13
      %1237 = vperm.xlu0 %1236, %v937
      %v1238 = vpop.permute.xlu0 %1237
      %v1240 = vmul.f32 %v1223, %v1238
      %v1241 = vadd.f32 %v1219, %v1240
      %v1242 = vmax.f32 %v1220, %v1223
      %s1243 = sadd.s32 %s678, 38
      %s1244 = smul.u32 %s1243, 8
      %s1245 = scalar_lea.vmem [#allocation2], %s1244
      %v1246 = vld [vmem:[%s1245] sm:$0xff]
      %1247 = vset.pattern.permute.xlu0 32
      %1248 = vperm.xlu0 %1247, %v687
      %v1249 = vpop.permute.xlu0 %1248
      %v1251 = vmul.f32 %v1246, %v1249
      %v1252 = vadd.f32 %v1207, %v1251
      %1253 = vset.pattern.permute.xlu0 23
      %1254 = vperm.xlu0 %1253, %v785
      %v1255 = vpop.permute.xlu0 %1254
      %v1257 = vmul.f32 %v1246, %v1255
      %v1258 = vadd.f32 %v1213, %v1257
      %1259 = vset.pattern.permute.xlu0 14
      %1260 = vperm.xlu0 %1259, %v937
      %v1261 = vpop.permute.xlu0 %1260
      %v1263 = vmul.f32 %v1246, %v1261
      %v1264 = vadd.f32 %v1241, %v1263
      %v1265 = vmax.f32 %v1242, %v1246
      %s1266 = sadd.s32 %s678, 11
      %s1267 = smul.u32 %s1266, 2
      %s1268 = smul.addr %s1267, 8
      %s1269 = scalar_lea.vmem [#allocation3], %s1268
      %v1270 = vld [vmem:[%s1269] sm:$0xff]
      %1271 = vset.pattern.permute.xlu0 33
      %1272 = vperm.xlu0 %1271, %v687
      %v1273 = vpop.permute.xlu0 %1272
      %v1275 = vmul.f32 %v1270, %v1273
      %v1276 = vadd.f32 %v1229, %v1275
      %1277 = vset.pattern.permute.xlu0 24
      %1278 = vperm.xlu0 %1277, %v785
      %v1279 = vpop.permute.xlu0 %1278
      %v1281 = vmul.f32 %v1270, %v1279
      %v1282 = vadd.f32 %v1235, %v1281
      %1283 = vset.pattern.permute.xlu0 15
      %1284 = vperm.xlu0 %1283, %v937
      %v1285 = vpop.permute.xlu0 %1284
      %v1287 = vmul.f32 %v1270, %v1285
      %v1288 = vadd.f32 %v1264, %v1287
      %v1289 = vmax.f32 %v1265, %v1270
      %s1290 = smul.u32 %s1266, 8
      %s1291 = scalar_lea.vmem [#allocation2], %s1290
      %v1292 = vld [vmem:[%s1291] sm:$0xff]
      %1293 = vset.pattern.permute.xlu0 34
      %1294 = vperm.xlu0 %1293, %v687
      %v1295 = vpop.permute.xlu0 %1294
      %v1297 = vmul.f32 %v1292, %v1295
      %v1298 = vadd.f32 %v1252, %v1297
      %1299 = vset.pattern.permute.xlu0 25
      %1300 = vperm.xlu0 %1299, %v785
      %v1301 = vpop.permute.xlu0 %1300
      %v1303 = vmul.f32 %v1292, %v1301
      %v1304 = vadd.f32 %v1258, %v1303
      %1305 = vset.pattern.permute.xlu0 16
      %1306 = vperm.xlu0 %1305, %v937
      %v1307 = vpop.permute.xlu0 %1306
      %v1309 = vmul.f32 %v1292, %v1307
      %v1310 = vadd.f32 %v1288, %v1309
      %v1311 = vmax.f32 %v1289, %v1292
      %s1312 = sadd.s32 %s678, 39
      %s1313 = smul.u32 %s1312, 8
      %s1314 = scalar_lea.vmem [#allocation2], %s1313
      %v1315 = vld [vmem:[%s1314] sm:$0xff]
      %1316 = vset.pattern.permute.xlu0 35
      %1317 = vperm.xlu0 %1316, %v687
      %v1318 = vpop.permute.xlu0 %1317
      %v1320 = vmul.f32 %v1315, %v1318
      %v1321 = vadd.f32 %v1276, %v1320
      %1322 = vset.pattern.permute.xlu0 26
      %1323 = vperm.xlu0 %1322, %v785
      %v1324 = vpop.permute.xlu0 %1323
      %v1326 = vmul.f32 %v1315, %v1324
      %v1327 = vadd.f32 %v1282, %v1326
      %1328 = vset.pattern.permute.xlu0 17
      %1329 = vperm.xlu0 %1328, %v937
      %v1330 = vpop.permute.xlu0 %1329
      %v1332 = vmul.f32 %v1315, %v1330
      %v1333 = vadd.f32 %v1310, %v1332
      %v1334 = vmax.f32 %v1311, %v1315
      %s1335 = sadd.s32 %s678, 12
      %s1336 = smul.u32 %s1335, 2
      %s1337 = smul.addr %s1336, 8
      %s1338 = scalar_lea.vmem [#allocation3], %s1337
      %v1339 = vld [vmem:[%s1338] sm:$0xff]
      %1340 = vset.pattern.permute.xlu0 36
      %1341 = vperm.xlu0 %1340, %v687
      %v1342 = vpop.permute.xlu0 %1341
      %v1344 = vmul.f32 %v1339, %v1342
      %v1345 = vadd.f32 %v1298, %v1344
      %1346 = vset.pattern.permute.xlu0 27
      %1347 = vperm.xlu0 %1346, %v785
      %v1348 = vpop.permute.xlu0 %1347
      %v1350 = vmul.f32 %v1339, %v1348
      %v1351 = vadd.f32 %v1304, %v1350
      %s1352 = smul.u32 %s1335, 8
      %s1353 = scalar_lea.vmem [#allocation2], %s1352
      %v1354 = vld [vmem:[%s1353] sm:$0xff]
      %1355 = vset.pattern.permute.xlu0 37
      %1356 = vperm.xlu0 %1355, %v687
      %v1357 = vpop.permute.xlu0 %1356
      %v1359 = vmul.f32 %v1354, %v1357
      %v1360 = vadd.f32 %v1321, %v1359
      %1361 = vset.pattern.permute.xlu0 28
      %1362 = vperm.xlu0 %1361, %v785
      %v1363 = vpop.permute.xlu0 %1362
      %v1365 = vmul.f32 %v1354, %v1363
      %v1366 = vadd.f32 %v1327, %v1365
      %s1367 = sadd.s32 %s678, 40
      %s1368 = smul.u32 %s1367, 8
      %s1369 = scalar_lea.vmem [#allocation2], %s1368
      %v1370 = vld [vmem:[%s1369] sm:$0xff]
      %1371 = vset.pattern.permute.xlu0 38
      %1372 = vperm.xlu0 %1371, %v687
      %v1373 = vpop.permute.xlu0 %1372
      %v1375 = vmul.f32 %v1370, %v1373
      %v1376 = vadd.f32 %v1345, %v1375
      %1377 = vset.pattern.permute.xlu0 29
      %1378 = vperm.xlu0 %1377, %v785
      %v1379 = vpop.permute.xlu0 %1378
      %v1381 = vmul.f32 %v1370, %v1379
      %v1382 = vadd.f32 %v1351, %v1381
      %s1383 = sadd.s32 %s678, 13
      %s1384 = smul.u32 %s1383, 2
      %s1385 = smul.addr %s1384, 8
      %s1386 = scalar_lea.vmem [#allocation3], %s1385
      %v1387 = vld [vmem:[%s1386] sm:$0xff]
      %1388 = vset.pattern.permute.xlu0 39
      %1389 = vperm.xlu0 %1388, %v687
      %v1390 = vpop.permute.xlu0 %1389
      %v1392 = vmul.f32 %v1387, %v1390
      %v1393 = vadd.f32 %v1360, %v1392
      %1394 = vset.pattern.permute.xlu0 30
      %1395 = vperm.xlu0 %1394, %v785
      %v1396 = vpop.permute.xlu0 %1395
      %v1398 = vmul.f32 %v1387, %v1396
      %v1399 = vadd.f32 %v1366, %v1398
      %s1400 = smul.u32 %s1383, 8
      %s1401 = scalar_lea.vmem [#allocation2], %s1400
      %v1402 = vld [vmem:[%s1401] sm:$0xff]
      %1403 = vset.pattern.permute.xlu0 40
      %1404 = vperm.xlu0 %1403, %v687
      %v1405 = vpop.permute.xlu0 %1404
      %v1407 = vmul.f32 %v1402, %v1405
      %v1408 = vadd.f32 %v1376, %v1407
      %1409 = vset.pattern.permute.xlu0 31
      %1410 = vperm.xlu0 %1409, %v785
      %v1411 = vpop.permute.xlu0 %1410
      %v1413 = vmul.f32 %v1402, %v1411
      %v1414 = vadd.f32 %v1382, %v1413
      %s1415 = sadd.s32 %s678, 41
      %s1416 = smul.u32 %s1415, 8
      %s1417 = scalar_lea.vmem [#allocation2], %s1416
      %v1418 = vld [vmem:[%s1417] sm:$0xff]
      %1419 = vset.pattern.permute.xlu0 41
      %1420 = vperm.xlu0 %1419, %v687
      %v1421 = vpop.permute.xlu0 %1420
      %v1423 = vmul.f32 %v1418, %v1421
      %v1424 = vadd.f32 %v1393, %v1423
      %1425 = vset.pattern.permute.xlu0 32
      %1426 = vperm.xlu0 %1425, %v785
      %v1427 = vpop.permute.xlu0 %1426
      %v1429 = vmul.f32 %v1418, %v1427
      %v1430 = vadd.f32 %v1399, %v1429
      %s1431 = sadd.s32 %s678, 14
      %s1432 = smul.u32 %s1431, 2
      %s1433 = smul.addr %s1432, 8
      %s1434 = scalar_lea.vmem [#allocation3], %s1433
      %v1435 = vld [vmem:[%s1434] sm:$0xff]
      %1436 = vset.pattern.permute.xlu0 42
      %1437 = vperm.xlu0 %1436, %v687
      %v1438 = vpop.permute.xlu0 %1437
      %v1440 = vmul.f32 %v1435, %v1438
      %v1441 = vadd.f32 %v1408, %v1440
      %1442 = vset.pattern.permute.xlu0 33
      %1443 = vperm.xlu0 %1442, %v785
      %v1444 = vpop.permute.xlu0 %1443
      %v1446 = vmul.f32 %v1435, %v1444
      %v1447 = vadd.f32 %v1414, %v1446
      %s1448 = smul.u32 %s1431, 8
      %s1449 = scalar_lea.vmem [#allocation2], %s1448
      %v1450 = vld [vmem:[%s1449] sm:$0xff]
      %1451 = vset.pattern.permute.xlu0 43
      %1452 = vperm.xlu0 %1451, %v687
      %v1453 = vpop.permute.xlu0 %1452
      %v1455 = vmul.f32 %v1450, %v1453
      %v1456 = vadd.f32 %v1424, %v1455
      %1457 = vset.pattern.permute.xlu0 34
      %1458 = vperm.xlu0 %1457, %v785
      %v1459 = vpop.permute.xlu0 %1458
      %v1461 = vmul.f32 %v1450, %v1459
      %v1462 = vadd.f32 %v1430, %v1461
      %s1463 = sadd.s32 %s678, 42
      %s1464 = smul.u32 %s1463, 8
      %s1465 = scalar_lea.vmem [#allocation2], %s1464
      %v1466 = vld [vmem:[%s1465] sm:$0xff]
      %1467 = vset.pattern.permute.xlu0 44
      %1468 = vperm.xlu0 %1467, %v687
      %v1469 = vpop.permute.xlu0 %1468
      %v1471 = vmul.f32 %v1466, %v1469
      %v1472 = vadd.f32 %v1441, %v1471
      %1473 = vset.pattern.permute.xlu0 35
      %1474 = vperm.xlu0 %1473, %v785
      %v1475 = vpop.permute.xlu0 %1474
      %v1477 = vmul.f32 %v1466, %v1475
      %v1478 = vadd.f32 %v1447, %v1477
      %s1479 = sadd.s32 %s678, 15
      %s1480 = smul.u32 %s1479, 2
      %s1481 = smul.addr %s1480, 8
      %s1482 = scalar_lea.vmem [#allocation3], %s1481
      %v1483 = vld [vmem:[%s1482] sm:$0xff]
      %1484 = vset.pattern.permute.xlu0 45
      %1485 = vperm.xlu0 %1484, %v687
      %v1486 = vpop.permute.xlu0 %1485
      %v1488 = vmul.f32 %v1483, %v1486
      %v1489 = vadd.f32 %v1456, %v1488
      %s1490 = smul.u32 %s1479, 8
      %s1491 = scalar_lea.vmem [#allocation2], %s1490
      %v1492 = vld [vmem:[%s1491] sm:$0xff]
      %1493 = vset.pattern.permute.xlu0 46
      %1494 = vperm.xlu0 %1493, %v687
      %v1495 = vpop.permute.xlu0 %1494
      %v1497 = vmul.f32 %v1492, %v1495
      %v1498 = vadd.f32 %v1472, %v1497
      %s1499 = sadd.s32 %s678, 43
      %s1500 = smul.u32 %s1499, 8
      %s1501 = scalar_lea.vmem [#allocation2], %s1500
      %v1502 = vld [vmem:[%s1501] sm:$0xff]
      %1503 = vset.pattern.permute.xlu0 47
      %1504 = vperm.xlu0 %1503, %v687
      %v1505 = vpop.permute.xlu0 %1504
      %v1507 = vmul.f32 %v1502, %v1505
      %v1508 = vadd.f32 %v1489, %v1507
      %s1509 = sadd.s32 %s678, 16
      %s1510 = smul.u32 %s1509, 2
      %s1511 = smul.addr %s1510, 8
      %s1512 = scalar_lea.vmem [#allocation3], %s1511
      %v1513 = vld [vmem:[%s1512] sm:$0xff]
      %1514 = vset.pattern.permute.xlu0 48
      %1515 = vperm.xlu0 %1514, %v687
      %v1516 = vpop.permute.xlu0 %1515
      %v1518 = vmul.f32 %v1513, %v1516
      %v1519 = vadd.f32 %v1498, %v1518
      %s1520 = smul.u32 %s1509, 8
      %s1521 = scalar_lea.vmem [#allocation2], %s1520
      %v1522 = vld [vmem:[%s1521] sm:$0xff]
      %1523 = vset.pattern.permute.xlu0 49
      %1524 = vperm.xlu0 %1523, %v687
      %v1525 = vpop.permute.xlu0 %1524
      %v1527 = vmul.f32 %v1522, %v1525
      %v1528 = vadd.f32 %v1508, %v1527
      %s1529 = sadd.s32 %s678, 44
      %s1530 = smul.u32 %s1529, 8
      %s1531 = scalar_lea.vmem [#allocation2], %s1530
      %v1532 = vld [vmem:[%s1531] sm:$0xff]
      %1533 = vset.pattern.permute.xlu0 50
      %1534 = vperm.xlu0 %1533, %v687
      %v1535 = vpop.permute.xlu0 %1534
      %v1537 = vmul.f32 %v1532, %v1535
      %v1538 = vadd.f32 %v1519, %v1537
      %s1539 = sadd.s32 %s678, 17
      %s1540 = smul.u32 %s1539, 2
      %s1541 = smul.addr %s1540, 8
      %s1542 = scalar_lea.vmem [#allocation3], %s1541
      %v1543 = vld [vmem:[%s1542] sm:$0xff]
      %1544 = vset.pattern.permute.xlu0 51
      %1545 = vperm.xlu0 %1544, %v687
      %v1546 = vpop.permute.xlu0 %1545
      %v1548 = vmul.f32 %v1543, %v1546
      %v1549 = vadd.f32 %v1528, %v1548
      %s1550 = smul.u32 %s1539, 8
      %s1551 = scalar_lea.vmem [#allocation2], %s1550
      %v1552 = vld [vmem:[%s1551] sm:$0xff]
      %1553 = vset.pattern.permute.xlu0 52
      %1554 = vperm.xlu0 %1553, %v687
      %v1555 = vpop.permute.xlu0 %1554
      %v1557 = vmul.f32 %v1552, %v1555
      %v1558 = vadd.f32 %v1538, %v1557
      %s1559 = sadd.s32 %s678, 45
      %s1560 = smul.u32 %s1559, 8
      %s1561 = scalar_lea.vmem [#allocation2], %s1560
      %v1562 = vld [vmem:[%s1561] sm:$0xff]
      %1563 = vset.pattern.permute.xlu0 53
      %1564 = vperm.xlu0 %1563, %v687
      %v1565 = vpop.permute.xlu0 %1564
      %v1567 = vmul.f32 %v1562, %v1565
      %v1568 = vadd.f32 %v1549, %v1567
      %1570 = vset.pattern.permute.xlu0 0
      %1571 = vperm.xlu0 %1570, %v674
      %v1572 = vpop.permute.xlu0 %1571
      %v1574 = vadd.f32 %v1333, %v1572
      %v1575 = vmax.f32 %v1574, 0.0
      %v1576 = vadd.f32 %v1478, %v1462
      %1578 = vset.pattern.permute.xlu0 0
      %1579 = vperm.xlu0 %1578, %v675
      %v1580 = vpop.permute.xlu0 %1579
      %v1582 = vadd.f32 %v1576, %v1580
      %v1583 = vmax.f32 %v1582, 0.0
      %v1584 = vadd.f32 %v1558, %v1568
      %1586 = vset.pattern.permute.xlu0 0
      %1587 = vperm.xlu0 %1586, %v676
      %v1588 = vpop.permute.xlu0 %1587
      %v1590 = vadd.f32 %v1584, %v1588
      %v1591 = vmax.f32 %v1590, 0.0
      %1593 = vset.pattern.permute.xlu0 0
      %1594 = vperm.xlu0 %1593, %v672
      %v1595 = vpop.permute.xlu0 %1594
      %vm1597 = vcmask 261120
      %v1599 = vsel %vm1597, %v671, 0
      %1601 = vmatpush.msra.mxu0 0.0
      %1602 = vmatpush.msra.mxu0 0.0
      %1603 = vmatpush.msra.mxu0 0.0
      %1604 = vmatpush.msra.mxu0 0.0
      %1605 = vmatpush.msra.mxu0 0.0
      %1606 = vmatpush.msra.mxu0 0.0
      %1607 = vmatpush.msra.mxu0 0.0
      %1608 = vmatpush.msra.mxu0 0.0
      %1609 = vmatpush.msra.mxu0 0.0
      %1610 = vmatpush.msra.mxu0 0.0
      %1611 = vmatpush.msra.mxu0 0.0
      %1612 = vmatpush.msra.mxu0 0.0
      %1613 = vmatpush.msra.mxu0 %v1334
      %1614 = vmatpush.msra.mxu0 %v1591
      %1615 = vmatpush.msra.mxu0 %v1583
      %1616 = vmatpush.msra.mxu0 %v1575
      %1617 = vmatmul.f32.gmra.mxu0 %v1599
      %v1618 = vpop.f32.mrf.mxu0
      %v1619 = vadd.f32 %v1595, %v1618
      %1620 = vdwg.mxu0
      %v1621 = vmax.f32 %v1619, 0.0
      %1623 = vset.pattern.permute.xlu0 0
      %1624 = vperm.xlu0 %1623, %v673
      %v1625 = vpop.permute.xlu0 %1624
      %v1627 = vmul.f32 %v1625, %v1621
      %v1628 = vsub.f32 1.0, %v673
      %1630 = vset.pattern.permute.xlu0 0
      %1631 = vperm.xlu0 %1630, %v1628
      %v1632 = vpop.permute.xlu0 %1631
      %v1634 = vmul.f32 %v1632, %v1619
      %v1635 = vadd.f32 %v1627, %v1634
      %s1636 = scalar_lea.vmem [#allocation6], %s695
      %1637 = vst [vmem:[%s1636] sm:$0xff] %v1635
    $region50: #{tpu_custom_call.1} parent=1 // loop_footer
      %s682 = sadd.s32 1, %s678
    $region51: #{tpu_custom_call.1} parent=1 // loop_footer_branch
      %677 = sbr.rel target = $region47
    $region52: #{tpu_custom_call.1} parent=1 // loop_exit
      _
    // Predicated region
    $region53: #{tpu_custom_call.1} parent=1 // pred_check
      _
    $region54: #{tpu_custom_call.1} parent=1 // pred_check_branch
      %1639 = sbr.rel (0) target = $region56
    $region55: #{tpu_custom_call.1} parent=1 // pred_region
      %1641 = vsyncadd [#allocation5], 0
      %s1642 = sshll.u32 [#allocation6], 4
      %s1643 = int_to_ptr.vmem [resolvable:$true] %s1642
      %s1644 = sshll.u32 %s10, 4
      %s1645 = int_to_ptr.hbm [resolvable:$true] %s1644
      %1650 = dma.vmem_to_hbm [thread:$0]  %s1643, 1408, %s1645, [#allocation5], 128, 128, 8
    $region56: #{tpu_custom_call.1} parent=1 // pred_fallthru
      _
    // Predicated region
    $region57: #{tpu_custom_call.1} parent=1 // pred_check
      _
    $region58: #{tpu_custom_call.1} parent=1 // pred_check_branch
      %1652 = sbr.rel (0) target = $region60
    $region59: #{tpu_custom_call.1} parent=1 // pred_region
      %1654 = dma.done [#allocation5], 1408
    $region60: #{tpu_custom_call.1} parent=1 // pred_fallthru
      _
    %1655 = vsyncpa [#allocation4], 1
    %1656 = vsyncpa [#allocation5], 1

</llo_original>
